<compile_context>
chip_gen: v6e
topology: v6e:2x2x1
jax: 0.10.0
libtpu: 0.0.40
codegen_flags: <defaults>
</compile_context>

<pallas_src>
import functools

import jax
import jax.numpy as jnp
import numpy as np
from jax import lax
from jax.experimental import pallas as pl
from jax.experimental.pallas import tpu as pltpu

_EPS = 1e-8
_LANE = 128
_SUBLANE = 8


def _round_up(x, m):
    return ((x + m - 1) // m) * m


def _pad_rows(x, n_rows):
    if x.shape[0] == n_rows:
        return x
    return jnp.pad(x, ((0, n_rows - x.shape[0]), (0, 0)))


def _vmem_budget_and_limit():
    """(tile-sizing budget, Mosaic scoped-VMEM limit) per chip generation."""
    try:
        cap = getattr(pltpu.get_tpu_info(), "vmem_capacity_bytes", None)
    except Exception:
        cap = None
    if cap is None:
        cap = 64 * 1024 * 1024                       # conservative (v7x-sized)
    if cap >= 100 * 1024 * 1024:                     # v5e / v6e: 128 MiB VMEM
        return 80 * 1024 * 1024, 96 * 1024 * 1024
    return 26 * 1024 * 1024, 40 * 1024 * 1024        # v7x: 64 MiB VMEM


def _choose_n_tiling(n, tn_req):
    """Pad N only to a lane multiple; pick tn so tile-multiple padding wastes
    at most 1/8 of the lane-padded N while keeping tiles as large as possible."""
    n_pad = _round_up(n, _LANE)
    tn = min(_round_up(max(tn_req, _LANE), _LANE), n_pad)
    while tn > _LANE and (_round_up(n_pad, tn) - n_pad) * 8 > n_pad:
        tn = _round_up(tn // 2, _LANE)
    return tn, _round_up(n_pad, tn)


def _cap_tm_to_vmem(tm, f, tn, out_cols, n_layers, dot_bytes, out_bytes, budget):
    """Shrink tm until the VMEM working set fits the per-chip budget."""
    wts = 2 * n_layers * (2 * f * f * dot_bytes + 2 * f * 4)   # dbl-buffered weights + f32 biases
    bnb = 2 * f * tn * dot_bytes                               # dbl-buffered projector tile
    fixed = wts + bnb + 2 * 1024 * 1024                        # + Mosaic internal scratch headroom

    def est(t):
        cam = 2 * t * f * dot_bytes            # dbl-buffered streamed camera tile
        out = 2 * t * out_cols * out_bytes     # dbl-buffered output tile
        an = t * f * dot_bytes                 # a_n scratch (matmul dtype)
        tmp = 4 * t * f * 4                    # f32 temporaries live in the j==0 MLP branch
        score = t * tn * 4                     # f32 score tile (pre-cast / argmax compare)
        return fixed + cam + out + an + tmp + score

    while tm > _SUBLANE and est(tm) > budget:
        tm = max(_SUBLANE, _round_up(tm // 2, _SUBLANE))
    return tm


# ----------------------------------------------------------------------------
# Shared in-kernel math: residual MLP blocks + extra residual + ZNCC normalize
# ----------------------------------------------------------------------------

def _mlp_residual_normalize(x0, w0s_ref, b0s_ref, w1s_ref, b1s_ref, *,
                            n_layers, dot_dtype):
    """x0: (rows, F) f32.  Returns row-wise zero-mean, L2-normalized
    (MLP(x0) + x0) in f32 — i.e. the ZNCC-ready operand."""
    x = x0
    for l in range(n_layers):                     # static unroll (n_layers small)
        h = jnp.dot(x.astype(dot_dtype), w0s_ref[l],
                    preferred_element_type=jnp.float32) + b0s_ref[l]
        h = jnp.maximum(h, 0.0)
        x = x + jnp.dot(h.astype(dot_dtype), w1s_ref[l],
                        preferred_element_type=jnp.float32) + b1s_ref[l]
    a = x + x0                                    # ZNCC_NN's extra residual
    a_c = a - jnp.mean(a, axis=-1, keepdims=True)
    inv = lax.rsqrt(jnp.sum(a_c * a_c, axis=-1, keepdims=True) + _EPS)
    return a_c * inv


# ----------------------------------------------------------------------------
# Pallas kernels
# ----------------------------------------------------------------------------

def _proj_norm_kernel(x_ref, w0s_ref, b0s_ref, w1s_ref, b1s_ref, o_ref, *,
                      n_layers, n_valid, dot_dtype):
    """One-shot projector path: normalized rows, pad-row mask and cast to the
    matmul dtype all fused.  Output: (N_pad, F) in dot_dtype."""
    bn_rows = _mlp_residual_normalize(
        x_ref[...].astype(jnp.float32), w0s_ref, b0s_ref, w1s_ref, b1s_ref,
        n_layers=n_layers, dot_dtype=dot_dtype)
    row = lax.broadcasted_iota(jnp.int32, bn_rows.shape, 0)
    bn_rows = jnp.where(row < n_valid, bn_rows, 0.0)
    o_ref[...] = bn_rows.astype(o_ref.dtype)


def _cam_zncc_map_kernel(cam_ref, w0s_ref, b0s_ref, w1s_ref, b1s_ref, bn_ref,
                         o_ref, an_ref, *, n_layers, dot_dtype):
    """Full ZNCC map.  Grid = (M tiles [parallel], N tiles [arbitrary]).
    Camera MLP + normalization runs once per M tile (j == 0) into VMEM scratch
    (stored in the matmul dtype) and is reused for every projector tile."""
    @pl.when(pl.program_id(1) == 0)
    def _():
        an_ref[...] = _mlp_residual_normalize(
            cam_ref[...].astype(jnp.float32), w0s_ref, b0s_ref, w1s_ref, b1s_ref,
            n_layers=n_layers, dot_dtype=dot_dtype).astype(an_ref.dtype)

    s = jnp.dot(an_ref[...], bn_ref[...], preferred_element_type=jnp.float32)
    o_ref[...] = s.astype(o_ref.dtype)


def _cam_zncc_argmax_kernel(cam_ref, w0s_ref, b0s_ref, w1s_ref, b1s_ref, bn_ref,
                            idx_ref, an_ref, max_ref, arg_ref, *,
                            n_layers, n_valid, tn, dot_dtype):
    """Fused argmax: never writes the (M, N) map to HBM.  Running (max, argidx)
    live in (tm, 1) VMEM scratch; padded projector columns are masked with -inf
    so they can never win even when all real correlations are negative."""
    j = pl.program_id(1)

    @pl.when(j == 0)
    def _():
        an_ref[...] = _mlp_residual_normalize(
            cam_ref[...].astype(jnp.float32), w0s_ref, b0s_ref, w1s_ref, b1s_ref,
            n_layers=n_layers, dot_dtype=dot_dtype).astype(an_ref.dtype)
        max_ref[...] = jnp.full_like(max_ref, -jnp.inf)
        arg_ref[...] = jnp.zeros_like(arg_ref)

    s = jnp.dot(an_ref[...], bn_ref[...], preferred_element_type=jnp.float32)
    col = lax.broadcasted_iota(jnp.int32, s.shape, 1) + j * tn      # global col id
    valid = col < n_valid
    s = jnp.where(valid, s, -jnp.inf)

    tile_max = jnp.max(s, axis=-1, keepdims=True)                   # (tm, 1)
    hit = (s == tile_max) & valid
    colf = col.astype(jnp.float32)                                  # exact < 2^24
    tile_arg = jnp.min(jnp.where(hit, colf, jnp.float32(2 ** 24)),
                       axis=-1, keepdims=True)                      # first occurrence

    better = tile_max > max_ref[...]                                # strict >: earlier tile wins ties
    arg_ref[...] = jnp.where(better, tile_arg, arg_ref[...])
    max_ref[...] = jnp.where(better, tile_max, max_ref[...])

    @pl.when(j == pl.num_programs(1) - 1)
    def _():
        idx_ref[...] = arg_ref[...].astype(jnp.int32)


# ----------------------------------------------------------------------------
# pallas_call wrappers
# ----------------------------------------------------------------------------

def _pack_blocks(blocks, matmul_dtype):
    """Stack layer params: weights -> matmul dtype, biases stay f32."""
    w0s = jnp.stack([b[0] for b in blocks]).astype(matmul_dtype)   # (L, F, F)
    b0s = jnp.stack([b[1] for b in blocks]).astype(jnp.float32)    # (L, 1, F)
    w1s = jnp.stack([b[2] for b in blocks]).astype(matmul_dtype)
    b1s = jnp.stack([b[3] for b in blocks]).astype(jnp.float32)
    return w0s, b0s, w1s, b1s


def _proj_normalize(proj_rows, packed, *, n_layers, n_valid, dot_dtype,
                    vmem_limit):
    n_rows, f = proj_rows.shape
    w0s, b0s, w1s, b1s = packed
    kernel = functools.partial(_proj_norm_kernel, n_layers=n_layers,
                               n_valid=n_valid, dot_dtype=dot_dtype)
    return pl.pallas_call(
        kernel,
        out_shape=jax.ShapeDtypeStruct((n_rows, f), dot_dtype),
        grid=(1,),
        in_specs=[
            pl.BlockSpec((n_rows, f), lambda i: (0, 0)),
            pl.BlockSpec(w0s.shape, lambda i: (0, 0, 0)),
            pl.BlockSpec(b0s.shape, lambda i: (0, 0, 0)),
            pl.BlockSpec(w1s.shape, lambda i: (0, 0, 0)),
            pl.BlockSpec(b1s.shape, lambda i: (0, 0, 0)),
        ],
        out_specs=pl.BlockSpec((n_rows, f), lambda i: (0, 0)),
        compiler_params=pltpu.CompilerParams(
            dimension_semantics=("arbitrary",),
            vmem_limit_bytes=vmem_limit),
    )(proj_rows, w0s, b0s, w1s, b1s)


def _cam_in_specs(w0s, b0s, w1s, b1s, tm, tn, f):
    return [
        pl.BlockSpec((tm, f), lambda i, j: (i, 0)),        # streamed cam tile
        pl.BlockSpec(w0s.shape, lambda i, j: (0, 0, 0)),   # grid-constant weights
        pl.BlockSpec(b0s.shape, lambda i, j: (0, 0, 0)),
        pl.BlockSpec(w1s.shape, lambda i, j: (0, 0, 0)),
        pl.BlockSpec(b1s.shape, lambda i, j: (0, 0, 0)),
        pl.BlockSpec((f, tn), lambda i, j: (0, j)),        # normalized projector tile
    ]


def _cam_zncc_map(cam_flat, packed, bn, *, n_layers, tm, tn, dot_dtype,
                  out_dtype, vmem_limit):
    m_pad, f = cam_flat.shape
    n_pad = bn.shape[1]
    w0s, b0s, w1s, b1s = packed
    kernel = functools.partial(_cam_zncc_map_kernel, n_layers=n_layers,
                               dot_dtype=dot_dtype)
    return pl.pallas_call(
        kernel,
        out_shape=jax.ShapeDtypeStruct((m_pad, n_pad), out_dtype),
        grid=(m_pad // tm, n_pad // tn),
        in_specs=_cam_in_specs(w0s, b0s, w1s, b1s, tm, tn, f),
        out_specs=pl.BlockSpec((tm, tn), lambda i, j: (i, j)),
        scratch_shapes=[pltpu.VMEM((tm, f), dot_dtype)],   # a_n across N tiles
        compiler_params=pltpu.CompilerParams(
            dimension_semantics=("parallel", "arbitrary"),
            vmem_limit_bytes=vmem_limit),
    )(cam_flat, w0s, b0s, w1s, b1s, bn)


def _cam_zncc_argmax(cam_flat, packed, bn, *, n_layers, n_valid, tm, tn,
                     dot_dtype, vmem_limit):
    m_pad, f = cam_flat.shape
    n_pad = bn.shape[1]
    w0s, b0s, w1s, b1s = packed
    kernel = functools.partial(_cam_zncc_argmax_kernel, n_layers=n_layers,
                               n_valid=n_valid, tn=tn, dot_dtype=dot_dtype)
    return pl.pallas_call(
        kernel,
        out_shape=jax.ShapeDtypeStruct((m_pad, 1), jnp.int32),
        grid=(m_pad // tm, n_pad // tn),
        in_specs=_cam_in_specs(w0s, b0s, w1s, b1s, tm, tn, f),
        out_specs=pl.BlockSpec((tm, 1), lambda i, j: (i, 0)),
        scratch_shapes=[pltpu.VMEM((tm, f), dot_dtype),    # a_n
                        pltpu.VMEM((tm, 1), jnp.float32),  # running max
                        pltpu.VMEM((tm, 1), jnp.float32)], # running argidx
        compiler_params=pltpu.CompilerParams(
            dimension_semantics=("parallel", "arbitrary"),
            vmem_limit_bytes=vmem_limit),
    )(cam_flat, w0s, b0s, w1s, b1s, bn)


# ----------------------------------------------------------------------------
# Plain-JAX glue (replicate-edge neighbor expansion, param init)
# ----------------------------------------------------------------------------

def expand_p_neighbor_jax(a, b, p):
    """a: (..., w_cam, k), b: (k, w_pat) -> ap: (..., w_cam, p*k), bp: (p*k, w_pat)."""
    t = p // 2
    k, w_pat = b.shape
    w_cam = a.shape[-2]
    a_arr, b_arr = [], []
    for i in range(-t, 0):
        s = -i
        a_tmp = jnp.concatenate(
            [jnp.broadcast_to(a[..., 0:1, :], a[..., :s, :].shape),
             a[..., :w_cam - s, :]], axis=-2)
        b_tmp = jnp.concatenate(
            [jnp.broadcast_to(b[:, 0:1], (k, s)), b[:, :w_pat - s]], axis=-1)
        a_arr.append(a_tmp)
        b_arr.append(b_tmp)
    a_arr.append(a)
    b_arr.append(b)
    for i in range(1, t + 1):
        a_tmp = jnp.concatenate(
            [a[..., i:, :], jnp.broadcast_to(a[..., -1:, :], a[..., :i, :].shape)],
            axis=-2)
        b_tmp = jnp.concatenate(
            [b[:, i:], jnp.broadcast_to(b[:, -1:], (k, i))], axis=-1)
        a_arr.append(a_tmp)
        b_arr.append(b_tmp)
    ap = jnp.concatenate(a_arr, axis=-1)
    bp = jnp.concatenate(b_arr, axis=-2)
    return ap, bp


def init_params(key, p, n_pat, n_layers=2):
    """Deterministic synthetic init. Weights stored already transposed: (in, out)."""
    n_feat = p * n_pat
    bound = 1.0 / np.sqrt(n_feat)
    params = {"F_proj": [], "F_cam": []}
    for name in ("F_proj", "F_cam"):
        for _ in range(n_layers):
            key, k0, k1, k2, k3 = jax.random.split(key, 5)
            w0 = jax.random.uniform(k0, (n_feat, n_feat), jnp.float32, -bound, bound)
            b0 = jax.random.uniform(k1, (1, n_feat), jnp.float32, -bound, bound)
            w1 = jax.random.uniform(k2, (n_feat, n_feat), jnp.float32, -bound, bound)
            b1 = jax.random.uniform(k3, (1, n_feat), jnp.float32, -bound, bound)
            params[name].append((w0, b0, w1, b1))
    return params


# ----------------------------------------------------------------------------
# Forward pass
# ----------------------------------------------------------------------------

def zncc_nn_forward(cam_code, proj_code, params, p, *, tm=1024, tn=2048,
                    matmul_dtype=jnp.bfloat16, out_dtype=None, argmax=False):
    """cam_code: (h_img, w_img, k); proj_code: (k, w_pat).
    Returns (h_img, w_img, w_pat) ZNCC map (out_dtype, default = matmul dtype)
    or, with argmax=True, an (h_img, w_img) int32 index map (fused in-kernel)."""
    p_cam, p_proj = expand_p_neighbor_jax(cam_code, proj_code, p)
    h, w, f = p_cam.shape
    n = p_proj.shape[-1]
    m = h * w

    n_layers = len(params["F_cam"])
    matmul_dtype = jnp.dtype(matmul_dtype)
    out_dtype = matmul_dtype if out_dtype is None else jnp.dtype(out_dtype)
    dot_bytes = matmul_dtype.itemsize
    budget, vmem_limit = _vmem_budget_and_limit()

    # N: lane-dense padding only, tile chosen with bounded padding waste.
    tn_eff, n_pad = _choose_n_tiling(n, tn)

    # M: VMEM-capped tile, then pad M to a tile multiple (waste <= tm-1 rows).
    out_cols = 1 if argmax else tn_eff
    out_bytes = 4 if argmax else out_dtype.itemsize
    tm_eff = min(_round_up(max(tm, _SUBLANE), _SUBLANE), _round_up(m, _SUBLANE))
    tm_eff = _cap_tm_to_vmem(tm_eff, f, tn_eff, out_cols, n_layers,
                             dot_bytes, out_bytes, budget)
    m_pad = _round_up(m, tm_eff)

    # Camera activations streamed in the matmul dtype (halves the HBM read).
    cam_flat = _pad_rows(p_cam.reshape(m, f).astype(matmul_dtype), m_pad)
    proj_rows = _pad_rows(jnp.transpose(p_proj).astype(jnp.float32), n_pad)

    packed_cam = _pack_blocks(params["F_cam"], matmul_dtype)
    packed_proj = _pack_blocks(params["F_proj"], matmul_dtype)

    # Projector side: one-shot kernel fuses MLP + normalize + pad-row mask +
    # cast; only the tiny (N_pad, F) -> (F, N_pad) transpose stays in XLA
    # (F is generally not tile-aligned, and the tensor is KB-sized).
    y_n = _proj_normalize(proj_rows, packed_proj, n_layers=n_layers, n_valid=n,
                          dot_dtype=matmul_dtype, vmem_limit=vmem_limit)
    bn = jnp.transpose(y_n)                                   # (F, N_pad), matmul dtype

    if argmax:
        idx_pad = _cam_zncc_argmax(cam_flat, packed_cam, bn, n_layers=n_layers,
                                   n_valid=n, tm=tm_eff, tn=tn_eff,
                                   dot_dtype=matmul_dtype, vmem_limit=vmem_limit)
        return idx_pad[:m, 0].reshape(h, w)

    zncc_pad = _cam_zncc_map(cam_flat, packed_cam, bn, n_layers=n_layers,
                             tm=tm_eff, tn=tn_eff, dot_dtype=matmul_dtype,
                             out_dtype=out_dtype, vmem_limit=vmem_limit)
    return zncc_pad[:m, :n].reshape(h, w, n)


# ----------------------------------------------------------------------------
# Pure-JAX reference (correctness check only)
# ----------------------------------------------------------------------------

def _ref_block(x, w0, b0, w1, b1):
    h = jnp.maximum(x @ w0 + b0, 0.0)
    return x + h @ w1 + b1


def zncc_nn_reference(cam_code, proj_code, params, p):
    p_cam, p_proj = expand_p_neighbor_jax(cam_code, proj_code, p)
    x = p_cam
    for (w0, b0, w1, b1) in params["F_cam"]:
        x = _ref_block(x, w0, b0, w1, b1)
    y = jnp.transpose(p_proj)
    for (w0, b0, w1, b1) in params["F_proj"]:
        y = _ref_block(y, w0, b0, w1, b1)
    a = x + p_cam                                 # (h, w, F)
    bt = y + jnp.transpose(p_proj)                # (N, F)
    a_c = a - a.mean(-1, keepdims=True)
    b_c = bt - bt.mean(-1, keepdims=True)
    a_n = a_c * lax.rsqrt((a_c * a_c).sum(-1, keepdims=True) + _EPS)
    b_n = b_c * lax.rsqrt((b_c * b_c).sum(-1, keepdims=True) + _EPS)
    return jnp.einsum("hwf,nf->hwn", a_n, b_n)


if __name__ == "__main__":
    p, n_pat, n_layers = 3, 4, 2            # n_feat = p * n_pat = 12
    h_img, w_img, w_pat = 16, 24, 200       # M = 384 camera tokens, N = 200

    key = jax.random.PRNGKey(0)
    key, kc, kp, kw = jax.random.split(key, 4)
    cam_code = jax.random.normal(kc, (h_img, w_img, n_pat), jnp.float32)
    proj_code = jax.random.normal(kp, (n_pat, w_pat), jnp.float32)
    params = init_params(kw, p, n_pat, n_layers)

    ref = zncc_nn_reference(cam_code, proj_code, params, p)

    # 1) f32 everywhere with small tiles: exercises M/N padding, the 2-D grid
    #    and the j==0 scratch-reuse path; strict tolerance.
    out_f32 = zncc_nn_forward(cam_code, proj_code, params, p,
                              tm=128, tn=128, matmul_dtype=jnp.float32)
    out_f32 = jax.block_until_ready(out_f32)
    np.testing.assert_allclose(np.asarray(out_f32), np.asarray(ref),
                               rtol=1e-5, atol=1e-5)

    # 2) production defaults: big tiles, bf16 MXU operands, bf16 streamed
    #    camera input and bf16 output; looser tolerance.
    out_bf16 = zncc_nn_forward(cam_code, proj_code, params, p)
    out_bf16 = jax.block_until_ready(out_bf16)
    np.testing.assert_allclose(np.asarray(out_bf16.astype(jnp.float32)),
                               np.asarray(ref), rtol=5e-2, atol=5e-2)

    # 3) fused in-kernel argmax (f32): must match argmax of the kernel's own
    #    f32 map exactly (same math, same first-occurrence tie-break).
    idx_f32 = jax.block_until_ready(
        zncc_nn_forward(cam_code, proj_code, params, p,
                        tm=128, tn=128, matmul_dtype=jnp.float32, argmax=True))
    assert idx_f32.shape == (h_img, w_img)
    np.testing.assert_array_equal(np.asarray(idx_f32),
                                  np.asarray(jnp.argmax(out_f32, axis=-1)))

    # 4) fused argmax under production bf16: the chosen column must achieve a
    #    near-optimal reference correlation (robust to bf16-induced tie flips).
    idx_bf16 = jax.block_until_ready(
        zncc_nn_forward(cam_code, proj_code, params, p, argmax=True))
    ref_np = np.asarray(ref)
    chosen = np.take_along_axis(ref_np, np.asarray(idx_bf16)[..., None],
                                axis=-1)[..., 0]
    assert np.all(chosen >= ref_np.max(-1) - 1e-1)

    print("KERNEL_OK")
</pallas_src>

<mosaic_0001>
module attributes {stable_mosaic.version = 11 : i64} {
  func.func @_proj_norm_kernel(%arg0: i32, %arg1: memref<256x12xf32, #tpu.memory_space<vmem>>, %arg2: memref<2x12x12xf32, #tpu.memory_space<vmem>>, %arg3: memref<2x1x12xf32, #tpu.memory_space<vmem>>, %arg4: memref<2x12x12xf32, #tpu.memory_space<vmem>>, %arg5: memref<2x1x12xf32, #tpu.memory_space<vmem>>, %arg6: memref<256x12xf32, #tpu.memory_space<vmem>>) attributes {dimension_semantics = [#tpu.dimension_semantics<arbitrary>], iteration_bounds = array<i64: 1>, scalar_prefetch = 0 : i64, scratch_operands = 0 : i64, tpu.core_type = #tpu.core_type<tc>, window_params = [{pipeline_mode = #tpu.pipeline_mode<synchronous>, transform_indices = @transform_0, window_bounds = array<i64: 256, 12>}, {pipeline_mode = #tpu.pipeline_mode<synchronous>, transform_indices = @transform_1, window_bounds = array<i64: 2, 12, 12>}, {pipeline_mode = #tpu.pipeline_mode<synchronous>, transform_indices = @transform_2, window_bounds = array<i64: 2, 1, 12>}, {pipeline_mode = #tpu.pipeline_mode<synchronous>, transform_indices = @transform_3, window_bounds = array<i64: 2, 12, 12>}, {pipeline_mode = #tpu.pipeline_mode<synchronous>, transform_indices = @transform_4, window_bounds = array<i64: 2, 1, 12>}, {pipeline_mode = #tpu.pipeline_mode<synchronous>, transform_indices = @transform_5, window_bounds = array<i64: 256, 12>}]} {
    %c0 = arith.constant 0 : index
    %c0_0 = arith.constant 0 : index
    %0 = vector.load %arg1[%c0, %c0_0] : memref<256x12xf32, #tpu.memory_space<vmem>>, vector<256x12xf32>
    %c0_1 = arith.constant 0 : index
    %c0_2 = arith.constant 0 : index
    %c0_3 = arith.constant 0 : index
    %1 = vector.load %arg2[%c0_1, %c0_2, %c0_3] : memref<2x12x12xf32, #tpu.memory_space<vmem>>, vector<1x12x12xf32>
    %2 = vector.shape_cast %1 : vector<1x12x12xf32> to vector<12x12xf32>
    %cst = arith.constant dense<0.000000e+00> : vector<256x12xf32>
    %3 = tpu.matmul %0, %2, %cst {dimension_numbers = #tpu.dot_dimension_numbers<[1], [0], [0], [1], [0, 0, 1, 1], [], []>} : vector<256x12xf32>, vector<12x12xf32>, vector<256x12xf32> -> vector<256x12xf32>
    %c0_4 = arith.constant 0 : index
    %c0_5 = arith.constant 0 : index
    %c0_6 = arith.constant 0 : index
    %4 = vector.load %arg3[%c0_4, %c0_5, %c0_6] : memref<2x1x12xf32, #tpu.memory_space<vmem>>, vector<1x1x12xf32>
    %5 = vector.shape_cast %4 : vector<1x1x12xf32> to vector<1x12xf32>
    %6 = vector.broadcast %5 : vector<1x12xf32> to vector<256x12xf32>
    %7 = arith.addf %3, %6 : vector<256x12xf32>
    %cst_7 = arith.constant 0.000000e+00 : f32
    %8 = vector.broadcast %cst_7 : f32 to vector<256x12xf32>
    %9 = arith.maximumf %7, %8 : vector<256x12xf32>
    %c0_8 = arith.constant 0 : index
    %c0_9 = arith.constant 0 : index
    %c0_10 = arith.constant 0 : index
    %10 = vector.load %arg4[%c0_8, %c0_9, %c0_10] : memref<2x12x12xf32, #tpu.memory_space<vmem>>, vector<1x12x12xf32>
    %11 = vector.shape_cast %10 : vector<1x12x12xf32> to vector<12x12xf32>
    %cst_11 = arith.constant dense<0.000000e+00> : vector<256x12xf32>
    %12 = tpu.matmul %9, %11, %cst_11 {dimension_numbers = #tpu.dot_dimension_numbers<[1], [0], [0], [1], [0, 0, 1, 1], [], []>} : vector<256x12xf32>, vector<12x12xf32>, vector<256x12xf32> -> vector<256x12xf32>
    %13 = arith.addf %0, %12 : vector<256x12xf32>
    %c0_12 = arith.constant 0 : index
    %c0_13 = arith.constant 0 : index
    %c0_14 = arith.constant 0 : index
    %14 = vector.load %arg5[%c0_12, %c0_13, %c0_14] : memref<2x1x12xf32, #tpu.memory_space<vmem>>, vector<1x1x12xf32>
    %15 = vector.shape_cast %14 : vector<1x1x12xf32> to vector<1x12xf32>
    %16 = vector.broadcast %15 : vector<1x12xf32> to vector<256x12xf32>
    %17 = arith.addf %13, %16 : vector<256x12xf32>
    %c1 = arith.constant 1 : index
    %c0_15 = arith.constant 0 : index
    %c0_16 = arith.constant 0 : index
    %18 = vector.load %arg2[%c1, %c0_15, %c0_16] : memref<2x12x12xf32, #tpu.memory_space<vmem>>, vector<1x12x12xf32>
    %19 = vector.shape_cast %18 : vector<1x12x12xf32> to vector<12x12xf32>
    %cst_17 = arith.constant dense<0.000000e+00> : vector<256x12xf32>
    %20 = tpu.matmul %17, %19, %cst_17 {dimension_numbers = #tpu.dot_dimension_numbers<[1], [0], [0], [1], [0, 0, 1, 1], [], []>} : vector<256x12xf32>, vector<12x12xf32>, vector<256x12xf32> -> vector<256x12xf32>
    %c1_18 = arith.constant 1 : index
    %c0_19 = arith.constant 0 : index
    %c0_20 = arith.constant 0 : index
    %21 = vector.load %arg3[%c1_18, %c0_19, %c0_20] : memref<2x1x12xf32, #tpu.memory_space<vmem>>, vector<1x1x12xf32>
    %22 = vector.shape_cast %21 : vector<1x1x12xf32> to vector<1x12xf32>
    %23 = vector.broadcast %22 : vector<1x12xf32> to vector<256x12xf32>
    %24 = arith.addf %20, %23 : vector<256x12xf32>
    %cst_21 = arith.constant 0.000000e+00 : f32
    %25 = vector.broadcast %cst_21 : f32 to vector<256x12xf32>
    %26 = arith.maximumf %24, %25 : vector<256x12xf32>
    %c1_22 = arith.constant 1 : index
    %c0_23 = arith.constant 0 : index
    %c0_24 = arith.constant 0 : index
    %27 = vector.load %arg4[%c1_22, %c0_23, %c0_24] : memref<2x12x12xf32, #tpu.memory_space<vmem>>, vector<1x12x12xf32>
    %28 = vector.shape_cast %27 : vector<1x12x12xf32> to vector<12x12xf32>
    %cst_25 = arith.constant dense<0.000000e+00> : vector<256x12xf32>
    %29 = tpu.matmul %26, %28, %cst_25 {dimension_numbers = #tpu.dot_dimension_numbers<[1], [0], [0], [1], [0, 0, 1, 1], [], []>} : vector<256x12xf32>, vector<12x12xf32>, vector<256x12xf32> -> vector<256x12xf32>
    %30 = arith.addf %17, %29 : vector<256x12xf32>
    %c1_26 = arith.constant 1 : index
    %c0_27 = arith.constant 0 : index
    %c0_28 = arith.constant 0 : index
    %31 = vector.load %arg5[%c1_26, %c0_27, %c0_28] : memref<2x1x12xf32, #tpu.memory_space<vmem>>, vector<1x1x12xf32>
    %32 = vector.shape_cast %31 : vector<1x1x12xf32> to vector<1x12xf32>
    %33 = vector.broadcast %32 : vector<1x12xf32> to vector<256x12xf32>
    %34 = arith.addf %30, %33 : vector<256x12xf32>
    %35 = arith.addf %34, %0 : vector<256x12xf32>
    %cst_29 = arith.constant dense<0.000000e+00> : vector<256xf32>
    %36 = vector.multi_reduction <add>, %35, %cst_29 [1] : vector<256x12xf32> to vector<256xf32>
    %37 = vector.shape_cast %36 : vector<256xf32> to vector<256x1xf32>
    %cst_30 = arith.constant 1.200000e+01 : f32
    %38 = vector.broadcast %cst_30 : f32 to vector<256x1xf32>
    %39 = arith.divf %37, %38 : vector<256x1xf32>
    %40 = vector.broadcast %39 : vector<256x1xf32> to vector<256x12xf32>
    %41 = arith.subf %35, %40 : vector<256x12xf32>
    %42 = arith.mulf %41, %41 : vector<256x12xf32>
    %cst_31 = arith.constant dense<0.000000e+00> : vector<256xf32>
    %43 = vector.multi_reduction <add>, %42, %cst_31 [1] : vector<256x12xf32> to vector<256xf32>
    %44 = vector.shape_cast %43 : vector<256xf32> to vector<256x1xf32>
    %cst_32 = arith.constant 9.99999993E-9 : f32
    %45 = vector.broadcast %cst_32 : f32 to vector<256x1xf32>
    %46 = arith.addf %44, %45 : vector<256x1xf32>
    %47 = math.rsqrt %46 : vector<256x1xf32>
    %48 = vector.broadcast %47 : vector<256x1xf32> to vector<256x12xf32>
    %49 = arith.mulf %41, %48 : vector<256x12xf32>
    %50 = tpu.iota {dimensions = array<i32: 0>} : vector<256x12xi32>
    %c200_i32 = arith.constant 200 : i32
    %51 = vector.broadcast %c200_i32 : i32 to vector<256x12xi32>
    %52 = arith.cmpi slt, %50, %51 : vector<256x12xi32>
    %cst_33 = arith.constant 0.000000e+00 : f32
    %53 = vector.broadcast %cst_33 : f32 to vector<256x12xf32>
    %54 = arith.select %52, %49, %53 : vector<256x12xi1>, vector<256x12xf32>
    %c0_34 = arith.constant 0 : index
    %c0_35 = arith.constant 0 : index
    %55 = vector.load %arg6[%c0_34, %c0_35] : memref<256x12xf32, #tpu.memory_space<vmem>>, vector<256x12xf32>
    tpu.vector_store %arg6[%c0_34, %c0_35], %54 {strides = array<i32>} : memref<256x12xf32, #tpu.memory_space<vmem>>, vector<256x12xf32>,
    return
  }
  func.func @transform_0(%arg0: i32) -> (i32, i32) {
    %c0_i32 = arith.constant 0 : i32
    %c0_i32_0 = arith.constant 0 : i32
    %c0_i32_1 = arith.constant 0 : i32
    return %c0_i32, %c0_i32_0 : i32, i32
  }
  func.func @transform_1(%arg0: i32) -> (i32, i32, i32) {
    %c0_i32 = arith.constant 0 : i32
    %c0_i32_0 = arith.constant 0 : i32
    %c0_i32_1 = arith.constant 0 : i32
    %c0_i32_2 = arith.constant 0 : i32
    return %c0_i32, %c0_i32_0, %c0_i32_1 : i32, i32, i32
  }
  func.func @transform_2(%arg0: i32) -> (i32, i32, i32) {
    %c0_i32 = arith.constant 0 : i32
    %c0_i32_0 = arith.constant 0 : i32
    %c0_i32_1 = arith.constant 0 : i32
    %c0_i32_2 = arith.constant 0 : i32
    return %c0_i32, %c0_i32_0, %c0_i32_1 : i32, i32, i32
  }
  func.func @transform_3(%arg0: i32) -> (i32, i32, i32) {
    %c0_i32 = arith.constant 0 : i32
    %c0_i32_0 = arith.constant 0 : i32
    %c0_i32_1 = arith.constant 0 : i32
    %c0_i32_2 = arith.constant 0 : i32
    return %c0_i32, %c0_i32_0, %c0_i32_1 : i32, i32, i32
  }
  func.func @transform_4(%arg0: i32) -> (i32, i32, i32) {
    %c0_i32 = arith.constant 0 : i32
    %c0_i32_0 = arith.constant 0 : i32
    %c0_i32_1 = arith.constant 0 : i32
    %c0_i32_2 = arith.constant 0 : i32
    return %c0_i32, %c0_i32_0, %c0_i32_1 : i32, i32, i32
  }
  func.func @transform_5(%arg0: i32) -> (i32, i32) {
    %c0_i32 = arith.constant 0 : i32
    %c0_i32_0 = arith.constant 0 : i32
    %c0_i32_1 = arith.constant 0 : i32
    return %c0_i32, %c0_i32_0 : i32, i32
  }
}

</mosaic_0001>

<llo_original>
// kernel: tpu_custom_call.1
$region0: #{tpu_custom_call.1}
  #allocation0 [shape = 'u32[]', space=smem, size = 0x4, offset = 0x4, fixed_abs, tag = 'smem constant byte address 0x4 - core index']
  #allocation1 [shape = 'u32[144,128]{1,0:T(1,128)}', space=vmem, size = 0x12000, scoped, tag = 'internal scratch']
  %s0 = inlined_call_operand.vmem [shape: f32[256,12], index: 0, kind: input, shape index: {}]
  %s1 = inlined_call_operand.vmem [shape: f32[2,12,12], index: 1, kind: input, shape index: {}]
  %s2 = inlined_call_operand.vmem [shape: f32[2,1,12], index: 2, kind: input, shape index: {}]
  %s3 = inlined_call_operand.vmem [shape: f32[2,12,12], index: 3, kind: input, shape index: {}]
  %s4 = inlined_call_operand.vmem [shape: f32[2,1,12], index: 4, kind: input, shape index: {}]
  %s5 = inlined_call_operand.vmem [shape: f32[256,12], index: 5, kind: output, shape index: {}]
  %s6 = sld [smem:[#allocation0]]
  $region30: #{tpu_custom_call.1} parent=0
    _
  %s8 = ssub.s32 1, %s6
  %s9 = scalar_select 0, %s8, %s6
  // Predicated region
  $region2: #{tpu_custom_call.1} parent=0 // pred_check
    _
  $region3: #{tpu_custom_call.1} parent=0 // pred_check_branch
    %11 = sbr.rel (0) target = $region5
  $region4: #{tpu_custom_call.1} parent=0 // pred_region
    _
  $region5: #{tpu_custom_call.1} parent=0 // pred_fallthru
    _
  // Predicated region
  $region6: #{tpu_custom_call.1} parent=0 // pred_check
    _
  $region7: #{tpu_custom_call.1} parent=0 // pred_check_branch
    %13 = sbr.rel (0) target = $region9
  $region8: #{tpu_custom_call.1} parent=0 // pred_region
    _
  $region9: #{tpu_custom_call.1} parent=0 // pred_fallthru
    _
  // Predicated region
  $region10: #{tpu_custom_call.1} parent=0 // pred_check
    _
  $region11: #{tpu_custom_call.1} parent=0 // pred_check_branch
    %15 = sbr.rel (0) target = $region13
  $region12: #{tpu_custom_call.1} parent=0 // pred_region
    _
  $region13: #{tpu_custom_call.1} parent=0 // pred_fallthru
    _
  // Predicated region
  $region14: #{tpu_custom_call.1} parent=0 // pred_check
    _
  $region15: #{tpu_custom_call.1} parent=0 // pred_check_branch
    %17 = sbr.rel (0) target = $region17
  $region16: #{tpu_custom_call.1} parent=0 // pred_region
    _
  $region17: #{tpu_custom_call.1} parent=0 // pred_fallthru
    _
  // Predicated region
  $region18: #{tpu_custom_call.1} parent=0 // pred_check
    _
  $region19: #{tpu_custom_call.1} parent=0 // pred_check_branch
    %19 = sbr.rel (0) target = $region21
  $region20: #{tpu_custom_call.1} parent=0 // pred_region
    _
  $region21: #{tpu_custom_call.1} parent=0 // pred_fallthru
    _
  %v20 = vld [vmem:[%s0] sm:$0xff]
  %v21 = vld [vmem:[%s0 + $0x8] sm:$0xff]
  %v22 = vld [vmem:[%s0 + $0x10] sm:$0xff]
  %v23 = vld [vmem:[%s0 + $0x18] sm:$0xff]
  %v24 = vld [vmem:[%s0 + $0x20] sm:$0xff]
  %v25 = vld [vmem:[%s0 + $0x28] sm:$0xff]
  %v26 = vld [vmem:[%s0 + $0x30] sm:$0xff]
  %v27 = vld [vmem:[%s0 + $0x38] sm:$0xff]
  %v28 = vld [vmem:[%s0 + $0x40] sm:$0xff]
  %v29 = vld [vmem:[%s0 + $0x48] sm:$0xff]
  %v30 = vld [vmem:[%s0 + $0x50] sm:$0xff]
  %v31 = vld [vmem:[%s0 + $0x58] sm:$0xff]
  %v32 = vld [vmem:[%s0 + $0x60] sm:$0xff]
  %v33 = vld [vmem:[%s0 + $0x68] sm:$0xff]
  %v34 = vld [vmem:[%s0 + $0x70] sm:$0xff]
  %v35 = vld [vmem:[%s0 + $0x78] sm:$0xff]
  %v36 = vld [vmem:[%s0 + $0x80] sm:$0xff]
  %v37 = vld [vmem:[%s0 + $0x88] sm:$0xff]
  %v38 = vld [vmem:[%s0 + $0x90] sm:$0xff]
  %v39 = vld [vmem:[%s0 + $0x98] sm:$0xff]
  %v40 = vld [vmem:[%s0 + $0xa0] sm:$0xff]
  %v41 = vld [vmem:[%s0 + $0xa8] sm:$0xff]
  %v42 = vld [vmem:[%s0 + $0xb0] sm:$0xff]
  %v43 = vld [vmem:[%s0 + $0xb8] sm:$0xff]
  %v44 = vld [vmem:[%s0 + $0xc0] sm:$0xff]
  %v45 = vld [vmem:[%s0 + $0xc8] sm:$0xff]
  %v46 = vld [vmem:[%s0 + $0xd0] sm:$0xff]
  %v47 = vld [vmem:[%s0 + $0xd8] sm:$0xff]
  %v48 = vld [vmem:[%s0 + $0xe0] sm:$0xff]
  %v49 = vld [vmem:[%s0 + $0xe8] sm:$0xff]
  %v50 = vld [vmem:[%s0 + $0xf0] sm:$0xff]
  %v51 = vld [vmem:[%s0 + $0xf8] sm:$0xff]
  %v52 = vld [vmem:[%s1] sm:$0xff]
  %v53 = vld [vmem:[%s1 + $0x8] sm:$0xf]
  %v54 = vld [vmem:[%s2] sm:$0x1]
  %v56 = vlaneseq
  %v57 = vshrl.u32 %v56, 7
  %v58 = vsub.s32 0, %v57
  %v59 = vrot.slane %v54, %v58
  %vm61 = vcmask 97280
  %v63 = vsel %vm61, %v20, 0
  %v66 = vsel %vm61, %v21, 0
  %v69 = vsel %vm61, %v22, 0
  %v72 = vsel %vm61, %v23, 0
  %v75 = vsel %vm61, %v24, 0
  %v78 = vsel %vm61, %v25, 0
  %v81 = vsel %vm61, %v26, 0
  %v84 = vsel %vm61, %v27, 0
  %v87 = vsel %vm61, %v28, 0
  %v90 = vsel %vm61, %v29, 0
  %v93 = vsel %vm61, %v30, 0
  %v96 = vsel %vm61, %v31, 0
  %v99 = vsel %vm61, %v32, 0
  %v102 = vsel %vm61, %v33, 0
  %v105 = vsel %vm61, %v34, 0
  %v108 = vsel %vm61, %v35, 0
  %v111 = vsel %vm61, %v36, 0
  %v114 = vsel %vm61, %v37, 0
  %v117 = vsel %vm61, %v38, 0
  %v120 = vsel %vm61, %v39, 0
  %v123 = vsel %vm61, %v40, 0
  %v126 = vsel %vm61, %v41, 0
  %v129 = vsel %vm61, %v42, 0
  %v132 = vsel %vm61, %v43, 0
  %v135 = vsel %vm61, %v44, 0
  %v138 = vsel %vm61, %v45, 0
  %v141 = vsel %vm61, %v46, 0
  %v144 = vsel %vm61, %v47, 0
  %v147 = vsel %vm61, %v48, 0
  %v150 = vsel %vm61, %v49, 0
  %v153 = vsel %vm61, %v50, 0
  %v156 = vsel %vm61, %v51, 0
  %vm158 = vcmask 1043456
  %v160 = vsel %vm158, %v53, 0
  %162 = vmatprep.subr.mxu0 0.0
  %163 = vmatpush1.msra.mxu0 0.0
  %164 = vmatprep.subr.mxu0 0.0
  %165 = vmatpush1.msra.mxu0 0.0
  %166 = vmatprep.subr.mxu0 0.0
  %167 = vmatpush1.msra.mxu0 0.0
  %168 = vmatprep.subr.mxu0 0.0
  %169 = vmatpush1.msra.mxu0 0.0
  %170 = vmatprep.subr.mxu0 0.0
  %171 = vmatpush1.msra.mxu0 0.0
  %172 = vmatprep.subr.mxu0 0.0
  %173 = vmatpush1.msra.mxu0 0.0
  %174 = vmatprep.subr.mxu0 0.0
  %175 = vmatpush1.msra.mxu0 0.0
  %176 = vmatprep.subr.mxu0 0.0
  %177 = vmatpush1.msra.mxu0 0.0
  %178 = vmatprep.subr.mxu0 0.0
  %179 = vmatpush1.msra.mxu0 0.0
  %180 = vmatprep.subr.mxu0 0.0
  %181 = vmatpush1.msra.mxu0 0.0
  %182 = vmatprep.subr.mxu0 0.0
  %183 = vmatpush1.msra.mxu0 0.0
  %184 = vmatprep.subr.mxu0 0.0
  %185 = vmatpush1.msra.mxu0 0.0
  %186 = vmatprep.subr.mxu0 0.0
  %187 = vmatpush1.msra.mxu0 0.0
  %188 = vmatprep.subr.mxu0 0.0
  %189 = vmatpush1.msra.mxu0 0.0
  %190 = vmatprep.subr.mxu0 0.0
  %191 = vmatpush1.msra.mxu0 %v160
  %192 = vmatprep.subr.mxu0 0.0
  %193 = vmatpush1.msra.mxu0 %v52
  %194 = vmatprep.subr.mxu0 0.0
  %195 = vmatpush2.msra.mxu0 0.0
  %196 = vmatprep.subr.mxu0 0.0
  %197 = vmatpush2.msra.mxu0 0.0
  %198 = vmatprep.subr.mxu0 0.0
  %199 = vmatpush2.msra.mxu0 0.0
  %200 = vmatprep.subr.mxu0 0.0
  %201 = vmatpush2.msra.mxu0 0.0
  %202 = vmatprep.subr.mxu0 0.0
  %203 = vmatpush2.msra.mxu0 0.0
  %204 = vmatprep.subr.mxu0 0.0
  %205 = vmatpush2.msra.mxu0 0.0
  %206 = vmatprep.subr.mxu0 0.0
  %207 = vmatpush2.msra.mxu0 0.0
  %208 = vmatprep.subr.mxu0 0.0
  %209 = vmatpush2.msra.mxu0 0.0
  %210 = vmatprep.subr.mxu0 0.0
  %211 = vmatpush2.msra.mxu0 0.0
  %212 = vmatprep.subr.mxu0 0.0
  %213 = vmatpush2.msra.mxu0 0.0
  %214 = vmatprep.subr.mxu0 0.0
  %215 = vmatpush2.msra.mxu0 0.0
  %216 = vmatprep.subr.mxu0 0.0
  %217 = vmatpush2.msra.mxu0 0.0
  %218 = vmatprep.subr.mxu0 0.0
  %219 = vmatpush2.msra.mxu0 0.0
  %220 = vmatprep.subr.mxu0 0.0
  %221 = vmatpush2.msra.mxu0 0.0
  %222 = vmatprep.subr.mxu0 0.0
  %223 = vmatpush2.msra.mxu0 0.0
  %224 = vmatprep.subr.mxu0 0.0
  %225 = vmatpush2.msra.mxu0 0.0
  %226 = vmatprep.mubr.f32.mxu0 0.0
  %227 = vmatmul.mubr.f32.gmra.mxu0 %v63
  %v228 = vpop.f32.mrf.mxu0
  %v229 = vadd.f32 %v59, %v228
  %v230 = vpop.f32.mrf.mxu0
  %231 = vmatprep.mubr.f32.mxu0 0.0
  %232 = vmatmul.mubr.f32.gmra.mxu0 %v66
  %v233 = vpop.f32.mrf.mxu0
  %v234 = vadd.f32 %v59, %v233
  %v235 = vpop.f32.mrf.mxu0
  %236 = vmatprep.mubr.f32.mxu0 0.0
  %237 = vmatmul.mubr.f32.gmra.mxu0 %v69
  %v238 = vpop.f32.mrf.mxu0
  %v239 = vadd.f32 %v59, %v238
  %v240 = vpop.f32.mrf.mxu0
  %241 = vmatprep.mubr.f32.mxu0 0.0
  %242 = vmatmul.mubr.f32.gmra.mxu0 %v72
  %v243 = vpop.f32.mrf.mxu0
  %v244 = vadd.f32 %v59, %v243
  %v245 = vpop.f32.mrf.mxu0
  %246 = vmatprep.mubr.f32.mxu0 0.0
  %247 = vmatmul.mubr.f32.gmra.mxu0 %v75
  %v248 = vpop.f32.mrf.mxu0
  %v249 = vadd.f32 %v59, %v248
  %v250 = vpop.f32.mrf.mxu0
  %251 = vmatprep.mubr.f32.mxu0 0.0
  %252 = vmatmul.mubr.f32.gmra.mxu0 %v78
  %v253 = vpop.f32.mrf.mxu0
  %v254 = vadd.f32 %v59, %v253
  %v255 = vpop.f32.mrf.mxu0
  %256 = vmatprep.mubr.f32.mxu0 0.0
  %257 = vmatmul.mubr.f32.gmra.mxu0 %v81
  %v258 = vpop.f32.mrf.mxu0
  %v259 = vadd.f32 %v59, %v258
  %v260 = vpop.f32.mrf.mxu0
  %261 = vmatprep.mubr.f32.mxu0 0.0
  %262 = vmatmul.mubr.f32.gmra.mxu0 %v84
  %v263 = vpop.f32.mrf.mxu0
  %v264 = vadd.f32 %v59, %v263
  %v265 = vpop.f32.mrf.mxu0
  %266 = vmatprep.mubr.f32.mxu0 0.0
  %267 = vmatmul.mubr.f32.gmra.mxu0 %v87
  %v268 = vpop.f32.mrf.mxu0
  %v269 = vadd.f32 %v59, %v268
  %v270 = vpop.f32.mrf.mxu0
  %271 = vmatprep.mubr.f32.mxu0 0.0
  %272 = vmatmul.mubr.f32.gmra.mxu0 %v90
  %v273 = vpop.f32.mrf.mxu0
  %v274 = vadd.f32 %v59, %v273
  %v275 = vpop.f32.mrf.mxu0
  %276 = vmatprep.mubr.f32.mxu0 0.0
  %277 = vmatmul.mubr.f32.gmra.mxu0 %v93
  %v278 = vpop.f32.mrf.mxu0
  %v279 = vadd.f32 %v59, %v278
  %v280 = vpop.f32.mrf.mxu0
  %281 = vmatprep.mubr.f32.mxu0 0.0
  %282 = vmatmul.mubr.f32.gmra.mxu0 %v96
  %v283 = vpop.f32.mrf.mxu0
  %v284 = vadd.f32 %v59, %v283
  %v285 = vpop.f32.mrf.mxu0
  %286 = vmatprep.mubr.f32.mxu0 0.0
  %287 = vmatmul.mubr.f32.gmra.mxu0 %v99
  %v288 = vpop.f32.mrf.mxu0
  %v289 = vadd.f32 %v59, %v288
  %v290 = vpop.f32.mrf.mxu0
  %291 = vmatprep.mubr.f32.mxu0 0.0
  %292 = vmatmul.mubr.f32.gmra.mxu0 %v102
  %v293 = vpop.f32.mrf.mxu0
  %v294 = vadd.f32 %v59, %v293
  %v295 = vpop.f32.mrf.mxu0
  %296 = vmatprep.mubr.f32.mxu0 0.0
  %297 = vmatmul.mubr.f32.gmra.mxu0 %v105
  %v298 = vpop.f32.mrf.mxu0
  %v299 = vadd.f32 %v59, %v298
  %v300 = vpop.f32.mrf.mxu0
  %301 = vmatprep.mubr.f32.mxu0 0.0
  %302 = vmatmul.mubr.f32.gmra.mxu0 %v108
  %v303 = vpop.f32.mrf.mxu0
  %v304 = vadd.f32 %v59, %v303
  %v305 = vpop.f32.mrf.mxu0
  %306 = vmatprep.mubr.f32.mxu0 0.0
  %307 = vmatmul.mubr.f32.gmra.mxu0 %v111
  %v308 = vpop.f32.mrf.mxu0
  %v309 = vadd.f32 %v59, %v308
  %v310 = vpop.f32.mrf.mxu0
  %311 = vmatprep.mubr.f32.mxu0 0.0
  %312 = vmatmul.mubr.f32.gmra.mxu0 %v114
  %v313 = vpop.f32.mrf.mxu0
  %v314 = vadd.f32 %v59, %v313
  %v315 = vpop.f32.mrf.mxu0
  %316 = vmatprep.mubr.f32.mxu0 0.0
  %317 = vmatmul.mubr.f32.gmra.mxu0 %v117
  %v318 = vpop.f32.mrf.mxu0
  %v319 = vadd.f32 %v59, %v318
  %v320 = vpop.f32.mrf.mxu0
  %321 = vmatprep.mubr.f32.mxu0 0.0
  %322 = vmatmul.mubr.f32.gmra.mxu0 %v120
  %v323 = vpop.f32.mrf.mxu0
  %v324 = vadd.f32 %v59, %v323
  %v325 = vpop.f32.mrf.mxu0
  %326 = vmatprep.mubr.f32.mxu0 0.0
  %327 = vmatmul.mubr.f32.gmra.mxu0 %v123
  %v328 = vpop.f32.mrf.mxu0
  %v329 = vadd.f32 %v59, %v328
  %v330 = vpop.f32.mrf.mxu0
  %331 = vmatprep.mubr.f32.mxu0 0.0
  %332 = vmatmul.mubr.f32.gmra.mxu0 %v126
  %v333 = vpop.f32.mrf.mxu0
  %v334 = vadd.f32 %v59, %v333
  %v335 = vpop.f32.mrf.mxu0
  %336 = vmatprep.mubr.f32.mxu0 0.0
  %337 = vmatmul.mubr.f32.gmra.mxu0 %v129
  %v338 = vpop.f32.mrf.mxu0
  %v339 = vadd.f32 %v59, %v338
  %v340 = vpop.f32.mrf.mxu0
  %341 = vmatprep.mubr.f32.mxu0 0.0
  %342 = vmatmul.mubr.f32.gmra.mxu0 %v132
  %v343 = vpop.f32.mrf.mxu0
  %v344 = vadd.f32 %v59, %v343
  %v345 = vpop.f32.mrf.mxu0
  %346 = vmatprep.mubr.f32.mxu0 0.0
  %347 = vmatmul.mubr.f32.gmra.mxu0 %v135
  %v348 = vpop.f32.mrf.mxu0
  %v349 = vadd.f32 %v59, %v348
  %v350 = vpop.f32.mrf.mxu0
  %351 = vmatprep.mubr.f32.mxu0 0.0
  %352 = vmatmul.mubr.f32.gmra.mxu0 %v138
  %v353 = vpop.f32.mrf.mxu0
  %v354 = vadd.f32 %v59, %v353
  %v355 = vpop.f32.mrf.mxu0
  %356 = vmatprep.mubr.f32.mxu0 0.0
  %357 = vmatmul.mubr.f32.gmra.mxu0 %v141
  %v358 = vpop.f32.mrf.mxu0
  %v359 = vadd.f32 %v59, %v358
  %v360 = vpop.f32.mrf.mxu0
  %361 = vmatprep.mubr.f32.mxu0 0.0
  %362 = vmatmul.mubr.f32.gmra.mxu0 %v144
  %v363 = vpop.f32.mrf.mxu0
  %v364 = vadd.f32 %v59, %v363
  %v365 = vpop.f32.mrf.mxu0
  %366 = vmatprep.mubr.f32.mxu0 0.0
  %367 = vmatmul.mubr.f32.gmra.mxu0 %v147
  %v368 = vpop.f32.mrf.mxu0
  %v369 = vadd.f32 %v59, %v368
  %v370 = vpop.f32.mrf.mxu0
  %371 = vmatprep.mubr.f32.mxu0 0.0
  %372 = vmatmul.mubr.f32.gmra.mxu0 %v150
  %v373 = vpop.f32.mrf.mxu0
  %v374 = vadd.f32 %v59, %v373
  %v375 = vpop.f32.mrf.mxu0
  %376 = vmatprep.mubr.f32.mxu0 0.0
  %377 = vmatmul.mubr.f32.gmra.mxu0 %v153
  %v378 = vpop.f32.mrf.mxu0
  %v379 = vadd.f32 %v59, %v378
  %v380 = vpop.f32.mrf.mxu0
  %381 = vmatprep.mubr.f32.mxu0 0.0
  %382 = vmatmul.mubr.f32.gmra.mxu0 %v156
  %v383 = vpop.f32.mrf.mxu0
  %v384 = vadd.f32 %v59, %v383
  %v385 = vpop.f32.mrf.mxu0
  %386 = vdwg.mxu0
  %v387 = vmax.f32 %v229, 0.0
  %v388 = vmax.f32 %v234, 0.0
  %v389 = vmax.f32 %v239, 0.0
  %v390 = vmax.f32 %v244, 0.0
  %v391 = vmax.f32 %v249, 0.0
  %v392 = vmax.f32 %v254, 0.0
  %v393 = vmax.f32 %v259, 0.0
  %v394 = vmax.f32 %v264, 0.0
  %v395 = vmax.f32 %v269, 0.0
  %v396 = vmax.f32 %v274, 0.0
  %v397 = vmax.f32 %v279, 0.0
  %v398 = vmax.f32 %v284, 0.0
  %v399 = vmax.f32 %v289, 0.0
  %v400 = vmax.f32 %v294, 0.0
  %v401 = vmax.f32 %v299, 0.0
  %v402 = vmax.f32 %v304, 0.0
  %v403 = vmax.f32 %v309, 0.0
  %v404 = vmax.f32 %v314, 0.0
  %v405 = vmax.f32 %v319, 0.0
  %v406 = vmax.f32 %v324, 0.0
  %v407 = vmax.f32 %v329, 0.0
  %v408 = vmax.f32 %v334, 0.0
  %v409 = vmax.f32 %v339, 0.0
  %v410 = vmax.f32 %v344, 0.0
  %v411 = vmax.f32 %v349, 0.0
  %v412 = vmax.f32 %v354, 0.0
  %v413 = vmax.f32 %v359, 0.0
  %v414 = vmax.f32 %v364, 0.0
  %v415 = vmax.f32 %v369, 0.0
  %v416 = vmax.f32 %v374, 0.0
  %v417 = vmax.f32 %v379, 0.0
  %v418 = vmax.f32 %v384, 0.0
  %v419 = vld [vmem:[%s3] sm:$0xff]
  %v420 = vld [vmem:[%s3 + $0x8] sm:$0xf]
  %v422 = vsel %vm61, %v387, 0
  %v425 = vsel %vm61, %v388, 0
  %v428 = vsel %vm61, %v389, 0
  %v431 = vsel %vm61, %v390, 0
  %v434 = vsel %vm61, %v391, 0
  %v437 = vsel %vm61, %v392, 0
  %v440 = vsel %vm61, %v393, 0
  %v443 = vsel %vm61, %v394, 0
  %v446 = vsel %vm61, %v395, 0
  %v449 = vsel %vm61, %v396, 0
  %v452 = vsel %vm61, %v397, 0
  %v455 = vsel %vm61, %v398, 0
  %v458 = vsel %vm61, %v399, 0
  %v461 = vsel %vm61, %v400, 0
  %v464 = vsel %vm61, %v401, 0
  %v467 = vsel %vm61, %v402, 0
  %v470 = vsel %vm61, %v403, 0
  %v473 = vsel %vm61, %v404, 0
  %v476 = vsel %vm61, %v405, 0
  %v479 = vsel %vm61, %v406, 0
  %v482 = vsel %vm61, %v407, 0
  %v485 = vsel %vm61, %v408, 0
  %v488 = vsel %vm61, %v409, 0
  %v491 = vsel %vm61, %v410, 0
  %v494 = vsel %vm61, %v411, 0
  %v497 = vsel %vm61, %v412, 0
  %v500 = vsel %vm61, %v413, 0
  %v503 = vsel %vm61, %v414, 0
  %v506 = vsel %vm61, %v415, 0
  %v509 = vsel %vm61, %v416, 0
  %v512 = vsel %vm61, %v417, 0
  %v515 = vsel %vm61, %v418, 0
  %v518 = vsel %vm158, %v420, 0
  %520 = vmatprep.subr.mxu0 0.0
  %521 = vmatpush1.msra.mxu0 0.0
  %522 = vmatprep.subr.mxu0 0.0
  %523 = vmatpush1.msra.mxu0 0.0
  %524 = vmatprep.subr.mxu0 0.0
  %525 = vmatpush1.msra.mxu0 0.0
  %526 = vmatprep.subr.mxu0 0.0
  %527 = vmatpush1.msra.mxu0 0.0
  %528 = vmatprep.subr.mxu0 0.0
  %529 = vmatpush1.msra.mxu0 0.0
  %530 = vmatprep.subr.mxu0 0.0
  %531 = vmatpush1.msra.mxu0 0.0
  %532 = vmatprep.subr.mxu0 0.0
  %533 = vmatpush1.msra.mxu0 0.0
  %534 = vmatprep.subr.mxu0 0.0
  %535 = vmatpush1.msra.mxu0 0.0
  %536 = vmatprep.subr.mxu0 0.0
  %537 = vmatpush1.msra.mxu0 0.0
  %538 = vmatprep.subr.mxu0 0.0
  %539 = vmatpush1.msra.mxu0 0.0
  %540 = vmatprep.subr.mxu0 0.0
  %541 = vmatpush1.msra.mxu0 0.0
  %542 = vmatprep.subr.mxu0 0.0
  %543 = vmatpush1.msra.mxu0 0.0
  %544 = vmatprep.subr.mxu0 0.0
  %545 = vmatpush1.msra.mxu0 0.0
  %546 = vmatprep.subr.mxu0 0.0
  %547 = vmatpush1.msra.mxu0 0.0
  %548 = vmatprep.subr.mxu0 0.0
  %549 = vmatpush1.msra.mxu0 %v518
  %550 = vmatprep.subr.mxu0 0.0
  %551 = vmatpush1.msra.mxu0 %v419
  %552 = vmatprep.subr.mxu0 0.0
  %553 = vmatpush2.msra.mxu0 0.0
  %554 = vmatprep.subr.mxu0 0.0
  %555 = vmatpush2.msra.mxu0 0.0
  %556 = vmatprep.subr.mxu0 0.0
  %557 = vmatpush2.msra.mxu0 0.0
  %558 = vmatprep.subr.mxu0 0.0
  %559 = vmatpush2.msra.mxu0 0.0
  %560 = vmatprep.subr.mxu0 0.0
  %561 = vmatpush2.msra.mxu0 0.0
  %562 = vmatprep.subr.mxu0 0.0
  %563 = vmatpush2.msra.mxu0 0.0
  %564 = vmatprep.subr.mxu0 0.0
  %565 = vmatpush2.msra.mxu0 0.0
  %566 = vmatprep.subr.mxu0 0.0
  %567 = vmatpush2.msra.mxu0 0.0
  %568 = vmatprep.subr.mxu0 0.0
  %569 = vmatpush2.msra.mxu0 0.0
  %570 = vmatprep.subr.mxu0 0.0
  %571 = vmatpush2.msra.mxu0 0.0
  %572 = vmatprep.subr.mxu0 0.0
  %573 = vmatpush2.msra.mxu0 0.0
  %574 = vmatprep.subr.mxu0 0.0
  %575 = vmatpush2.msra.mxu0 0.0
  %576 = vmatprep.subr.mxu0 0.0
  %577 = vmatpush2.msra.mxu0 0.0
  %578 = vmatprep.subr.mxu0 0.0
  %579 = vmatpush2.msra.mxu0 0.0
  %580 = vmatprep.subr.mxu0 0.0
  %581 = vmatpush2.msra.mxu0 0.0
  %582 = vmatprep.subr.mxu0 0.0
  %583 = vmatpush2.msra.mxu0 0.0
  %584 = vmatprep.mubr.f32.mxu0 0.0
  %585 = vmatmul.mubr.f32.gmra.mxu0 %v422
  %v586 = vpop.f32.mrf.mxu0
  %v587 = vadd.f32 0.0, %v586
  %v588 = vpop.f32.mrf.mxu0
  %589 = vmatprep.mubr.f32.mxu0 0.0
  %590 = vmatmul.mubr.f32.gmra.mxu0 %v425
  %v591 = vpop.f32.mrf.mxu0
  %v592 = vadd.f32 0.0, %v591
  %v593 = vpop.f32.mrf.mxu0
  %594 = vmatprep.mubr.f32.mxu0 0.0
  %595 = vmatmul.mubr.f32.gmra.mxu0 %v428
  %v596 = vpop.f32.mrf.mxu0
  %v597 = vadd.f32 0.0, %v596
  %v598 = vpop.f32.mrf.mxu0
  %599 = vmatprep.mubr.f32.mxu0 0.0
  %600 = vmatmul.mubr.f32.gmra.mxu0 %v431
  %v601 = vpop.f32.mrf.mxu0
  %v602 = vadd.f32 0.0, %v601
  %v603 = vpop.f32.mrf.mxu0
  %604 = vmatprep.mubr.f32.mxu0 0.0
  %605 = vmatmul.mubr.f32.gmra.mxu0 %v434
  %v606 = vpop.f32.mrf.mxu0
  %v607 = vadd.f32 0.0, %v606
  %v608 = vpop.f32.mrf.mxu0
  %609 = vmatprep.mubr.f32.mxu0 0.0
  %610 = vmatmul.mubr.f32.gmra.mxu0 %v437
  %v611 = vpop.f32.mrf.mxu0
  %v612 = vadd.f32 0.0, %v611
  %v613 = vpop.f32.mrf.mxu0
  %614 = vmatprep.mubr.f32.mxu0 0.0
  %615 = vmatmul.mubr.f32.gmra.mxu0 %v440
  %v616 = vpop.f32.mrf.mxu0
  %v617 = vadd.f32 0.0, %v616
  %v618 = vpop.f32.mrf.mxu0
  %619 = vmatprep.mubr.f32.mxu0 0.0
  %620 = vmatmul.mubr.f32.gmra.mxu0 %v443
  %v621 = vpop.f32.mrf.mxu0
  %v622 = vadd.f32 0.0, %v621
  %v623 = vpop.f32.mrf.mxu0
  %624 = vmatprep.mubr.f32.mxu0 0.0
  %625 = vmatmul.mubr.f32.gmra.mxu0 %v446
  %v626 = vpop.f32.mrf.mxu0
  %v627 = vadd.f32 0.0, %v626
  %v628 = vpop.f32.mrf.mxu0
  %629 = vmatprep.mubr.f32.mxu0 0.0
  %630 = vmatmul.mubr.f32.gmra.mxu0 %v449
  %v631 = vpop.f32.mrf.mxu0
  %v632 = vadd.f32 0.0, %v631
  %v633 = vpop.f32.mrf.mxu0
  %634 = vmatprep.mubr.f32.mxu0 0.0
  %635 = vmatmul.mubr.f32.gmra.mxu0 %v452
  %v636 = vpop.f32.mrf.mxu0
  %v637 = vadd.f32 0.0, %v636
  %v638 = vpop.f32.mrf.mxu0
  %639 = vmatprep.mubr.f32.mxu0 0.0
  %640 = vmatmul.mubr.f32.gmra.mxu0 %v455
  %v641 = vpop.f32.mrf.mxu0
  %v642 = vadd.f32 0.0, %v641
  %v643 = vpop.f32.mrf.mxu0
  %644 = vmatprep.mubr.f32.mxu0 0.0
  %645 = vmatmul.mubr.f32.gmra.mxu0 %v458
  %v646 = vpop.f32.mrf.mxu0
  %v647 = vadd.f32 0.0, %v646
  %v648 = vpop.f32.mrf.mxu0
  %649 = vmatprep.mubr.f32.mxu0 0.0
  %650 = vmatmul.mubr.f32.gmra.mxu0 %v461
  %v651 = vpop.f32.mrf.mxu0
  %v652 = vadd.f32 0.0, %v651
  %v653 = vpop.f32.mrf.mxu0
  %654 = vmatprep.mubr.f32.mxu0 0.0
  %655 = vmatmul.mubr.f32.gmra.mxu0 %v464
  %v656 = vpop.f32.mrf.mxu0
  %v657 = vadd.f32 0.0, %v656
  %v658 = vpop.f32.mrf.mxu0
  %659 = vmatprep.mubr.f32.mxu0 0.0
  %660 = vmatmul.mubr.f32.gmra.mxu0 %v467
  %v661 = vpop.f32.mrf.mxu0
  %v662 = vadd.f32 0.0, %v661
  %v663 = vpop.f32.mrf.mxu0
  %664 = vmatprep.mubr.f32.mxu0 0.0
  %665 = vmatmul.mubr.f32.gmra.mxu0 %v470
  %v666 = vpop.f32.mrf.mxu0
  %v667 = vadd.f32 0.0, %v666
  %v668 = vpop.f32.mrf.mxu0
  %669 = vmatprep.mubr.f32.mxu0 0.0
  %670 = vmatmul.mubr.f32.gmra.mxu0 %v473
  %v671 = vpop.f32.mrf.mxu0
  %v672 = vadd.f32 0.0, %v671
  %v673 = vpop.f32.mrf.mxu0
  %674 = vmatprep.mubr.f32.mxu0 0.0
  %675 = vmatmul.mubr.f32.gmra.mxu0 %v476
  %v676 = vpop.f32.mrf.mxu0
  %v677 = vadd.f32 0.0, %v676
  %v678 = vpop.f32.mrf.mxu0
  %679 = vmatprep.mubr.f32.mxu0 0.0
  %680 = vmatmul.mubr.f32.gmra.mxu0 %v479
  %v681 = vpop.f32.mrf.mxu0
  %v682 = vadd.f32 0.0, %v681
  %v683 = vpop.f32.mrf.mxu0
  %684 = vmatprep.mubr.f32.mxu0 0.0
  %685 = vmatmul.mubr.f32.gmra.mxu0 %v482
  %v686 = vpop.f32.mrf.mxu0
  %v687 = vadd.f32 0.0, %v686
  %v688 = vpop.f32.mrf.mxu0
  %689 = vmatprep.mubr.f32.mxu0 0.0
  %690 = vmatmul.mubr.f32.gmra.mxu0 %v485
  %v691 = vpop.f32.mrf.mxu0
  %v692 = vadd.f32 0.0, %v691
  %v693 = vpop.f32.mrf.mxu0
  %694 = vmatprep.mubr.f32.mxu0 0.0
  %695 = vmatmul.mubr.f32.gmra.mxu0 %v488
  %v696 = vpop.f32.mrf.mxu0
  %v697 = vadd.f32 0.0, %v696
  %v698 = vpop.f32.mrf.mxu0
  %699 = vmatprep.mubr.f32.mxu0 0.0
  %700 = vmatmul.mubr.f32.gmra.mxu0 %v491
  %v701 = vpop.f32.mrf.mxu0
  %v702 = vadd.f32 0.0, %v701
  %v703 = vpop.f32.mrf.mxu0
  %704 = vmatprep.mubr.f32.mxu0 0.0
  %705 = vmatmul.mubr.f32.gmra.mxu0 %v494
  %v706 = vpop.f32.mrf.mxu0
  %v707 = vadd.f32 0.0, %v706
  %v708 = vpop.f32.mrf.mxu0
  %709 = vmatprep.mubr.f32.mxu0 0.0
  %710 = vmatmul.mubr.f32.gmra.mxu0 %v497
  %v711 = vpop.f32.mrf.mxu0
  %v712 = vadd.f32 0.0, %v711
  %v713 = vpop.f32.mrf.mxu0
  %714 = vmatprep.mubr.f32.mxu0 0.0
  %715 = vmatmul.mubr.f32.gmra.mxu0 %v500
  %v716 = vpop.f32.mrf.mxu0
  %v717 = vadd.f32 0.0, %v716
  %v718 = vpop.f32.mrf.mxu0
  %719 = vmatprep.mubr.f32.mxu0 0.0
  %720 = vmatmul.mubr.f32.gmra.mxu0 %v503
  %v721 = vpop.f32.mrf.mxu0
  %v722 = vadd.f32 0.0, %v721
  %v723 = vpop.f32.mrf.mxu0
  %724 = vmatprep.mubr.f32.mxu0 0.0
  %725 = vmatmul.mubr.f32.gmra.mxu0 %v506
  %v726 = vpop.f32.mrf.mxu0
  %v727 = vadd.f32 0.0, %v726
  %v728 = vpop.f32.mrf.mxu0
  %729 = vmatprep.mubr.f32.mxu0 0.0
  %730 = vmatmul.mubr.f32.gmra.mxu0 %v509
  %v731 = vpop.f32.mrf.mxu0
  %v732 = vadd.f32 0.0, %v731
  %v733 = vpop.f32.mrf.mxu0
  %734 = vmatprep.mubr.f32.mxu0 0.0
  %735 = vmatmul.mubr.f32.gmra.mxu0 %v512
  %v736 = vpop.f32.mrf.mxu0
  %v737 = vadd.f32 0.0, %v736
  %v738 = vpop.f32.mrf.mxu0
  %739 = vmatprep.mubr.f32.mxu0 0.0
  %740 = vmatmul.mubr.f32.gmra.mxu0 %v515
  %v741 = vpop.f32.mrf.mxu0
  %v742 = vadd.f32 0.0, %v741
  %v743 = vpop.f32.mrf.mxu0
  %744 = vdwg.mxu0
  %v745 = vadd.f32 %v20, %v587
  %v746 = vadd.f32 %v21, %v592
  %v747 = vadd.f32 %v22, %v597
  %v748 = vadd.f32 %v23, %v602
  %v749 = vadd.f32 %v24, %v607
  %v750 = vadd.f32 %v25, %v612
  %v751 = vadd.f32 %v26, %v617
  %v752 = vadd.f32 %v27, %v622
  %v753 = vadd.f32 %v28, %v627
  %v754 = vadd.f32 %v29, %v632
  %v755 = vadd.f32 %v30, %v637
  %v756 = vadd.f32 %v31, %v642
  %v757 = vadd.f32 %v32, %v647
  %v758 = vadd.f32 %v33, %v652
  %v759 = vadd.f32 %v34, %v657
  %v760 = vadd.f32 %v35, %v662
  %v761 = vadd.f32 %v36, %v667
  %v762 = vadd.f32 %v37, %v672
  %v763 = vadd.f32 %v38, %v677
  %v764 = vadd.f32 %v39, %v682
  %v765 = vadd.f32 %v40, %v687
  %v766 = vadd.f32 %v41, %v692
  %v767 = vadd.f32 %v42, %v697
  %v768 = vadd.f32 %v43, %v702
  %v769 = vadd.f32 %v44, %v707
  %v770 = vadd.f32 %v45, %v712
  %v771 = vadd.f32 %v46, %v717
  %v772 = vadd.f32 %v47, %v722
  %v773 = vadd.f32 %v48, %v727
  %v774 = vadd.f32 %v49, %v732
  %v775 = vadd.f32 %v50, %v737
  %v776 = vadd.f32 %v51, %v742
  %v777 = vld [vmem:[%s4] sm:$0x1]
  %v779 = vlaneseq
  %v780 = vshrl.u32 %v779, 7
  %v781 = vsub.s32 0, %v780
  %v782 = vrot.slane %v777, %v781
  %v784 = vadd.f32 %v745, %v782
  %v785 = vadd.f32 %v746, %v782
  %v786 = vadd.f32 %v747, %v782
  %v787 = vadd.f32 %v748, %v782
  %v788 = vadd.f32 %v749, %v782
  %v789 = vadd.f32 %v750, %v782
  %v790 = vadd.f32 %v751, %v782
  %v791 = vadd.f32 %v752, %v782
  %v792 = vadd.f32 %v753, %v782
  %v793 = vadd.f32 %v754, %v782
  %v794 = vadd.f32 %v755, %v782
  %v795 = vadd.f32 %v756, %v782
  %v796 = vadd.f32 %v757, %v782
  %v797 = vadd.f32 %v758, %v782
  %v798 = vadd.f32 %v759, %v782
  %v799 = vadd.f32 %v760, %v782
  %v800 = vadd.f32 %v761, %v782
  %v801 = vadd.f32 %v762, %v782
  %v802 = vadd.f32 %v763, %v782
  %v803 = vadd.f32 %v764, %v782
  %v804 = vadd.f32 %v765, %v782
  %v805 = vadd.f32 %v766, %v782
  %v806 = vadd.f32 %v767, %v782
  %v807 = vadd.f32 %v768, %v782
  %v808 = vadd.f32 %v769, %v782
  %v809 = vadd.f32 %v770, %v782
  %v810 = vadd.f32 %v771, %v782
  %v811 = vadd.f32 %v772, %v782
  %v812 = vadd.f32 %v773, %v782
  %v813 = vadd.f32 %v774, %v782
  %v814 = vadd.f32 %v775, %v782
  %v815 = vadd.f32 %v776, %v782
  %s816 = scalar_lea.vmem %s1, 16
  %v817 = vld [vmem:[%s816] sm:$0xff]
  %v818 = vld [vmem:[%s816 + $0x8] sm:$0xf]
  %s819 = scalar_lea.vmem %s2, 1
  %v820 = vld [vmem:[%s819] sm:$0x1]
  %v822 = vlaneseq
  %v823 = vshrl.u32 %v822, 7
  %v824 = vsub.s32 0, %v823
  %v825 = vrot.slane %v820, %v824
  %v828 = vsel %vm61, %v784, 0
  %v831 = vsel %vm61, %v785, 0
  %v834 = vsel %vm61, %v786, 0
  %v837 = vsel %vm61, %v787, 0
  %v840 = vsel %vm61, %v788, 0
  %v843 = vsel %vm61, %v789, 0
  %v846 = vsel %vm61, %v790, 0
  %v849 = vsel %vm61, %v791, 0
  %v852 = vsel %vm61, %v792, 0
  %v855 = vsel %vm61, %v793, 0
  %v858 = vsel %vm61, %v794, 0
  %v861 = vsel %vm61, %v795, 0
  %v864 = vsel %vm61, %v796, 0
  %v867 = vsel %vm61, %v797, 0
  %v870 = vsel %vm61, %v798, 0
  %v873 = vsel %vm61, %v799, 0
  %v876 = vsel %vm61, %v800, 0
  %v879 = vsel %vm61, %v801, 0
  %v882 = vsel %vm61, %v802, 0
  %v885 = vsel %vm61, %v803, 0
  %v888 = vsel %vm61, %v804, 0
  %v891 = vsel %vm61, %v805, 0
  %v894 = vsel %vm61, %v806, 0
  %v897 = vsel %vm61, %v807, 0
  %v900 = vsel %vm61, %v808, 0
  %v903 = vsel %vm61, %v809, 0
  %v906 = vsel %vm61, %v810, 0
  %v909 = vsel %vm61, %v811, 0
  %v912 = vsel %vm61, %v812, 0
  %v915 = vsel %vm61, %v813, 0
  %v918 = vsel %vm61, %v814, 0
  %v921 = vsel %vm61, %v815, 0
  %v924 = vsel %vm158, %v818, 0
  %926 = vmatprep.subr.mxu0 0.0
  %927 = vmatpush1.msra.mxu0 0.0
  %928 = vmatprep.subr.mxu0 0.0
  %929 = vmatpush1.msra.mxu0 0.0
  %930 = vmatprep.subr.mxu0 0.0
  %931 = vmatpush1.msra.mxu0 0.0
  %932 = vmatprep.subr.mxu0 0.0
  %933 = vmatpush1.msra.mxu0 0.0
  %934 = vmatprep.subr.mxu0 0.0
  %935 = vmatpush1.msra.mxu0 0.0
  %936 = vmatprep.subr.mxu0 0.0
  %937 = vmatpush1.msra.mxu0 0.0
  %938 = vmatprep.subr.mxu0 0.0
  %939 = vmatpush1.msra.mxu0 0.0
  %940 = vmatprep.subr.mxu0 0.0
  %941 = vmatpush1.msra.mxu0 0.0
  %942 = vmatprep.subr.mxu0 0.0
  %943 = vmatpush1.msra.mxu0 0.0
  %944 = vmatprep.subr.mxu0 0.0
  %945 = vmatpush1.msra.mxu0 0.0
  %946 = vmatprep.subr.mxu0 0.0
  %947 = vmatpush1.msra.mxu0 0.0
  %948 = vmatprep.subr.mxu0 0.0
  %949 = vmatpush1.msra.mxu0 0.0
  %950 = vmatprep.subr.mxu0 0.0
  %951 = vmatpush1.msra.mxu0 0.0
  %952 = vmatprep.subr.mxu0 0.0
  %953 = vmatpush1.msra.mxu0 0.0
  %954 = vmatprep.subr.mxu0 0.0
  %955 = vmatpush1.msra.mxu0 %v924
  %956 = vmatprep.subr.mxu0 0.0
  %957 = vmatpush1.msra.mxu0 %v817
  %958 = vmatprep.subr.mxu0 0.0
  %959 = vmatpush2.msra.mxu0 0.0
  %960 = vmatprep.subr.mxu0 0.0
  %961 = vmatpush2.msra.mxu0 0.0
  %962 = vmatprep.subr.mxu0 0.0
  %963 = vmatpush2.msra.mxu0 0.0
  %964 = vmatprep.subr.mxu0 0.0
  %965 = vmatpush2.msra.mxu0 0.0
  %966 = vmatprep.subr.mxu0 0.0
  %967 = vmatpush2.msra.mxu0 0.0
  %968 = vmatprep.subr.mxu0 0.0
  %969 = vmatpush2.msra.mxu0 0.0
  %970 = vmatprep.subr.mxu0 0.0
  %971 = vmatpush2.msra.mxu0 0.0
  %972 = vmatprep.subr.mxu0 0.0
  %973 = vmatpush2.msra.mxu0 0.0
  %974 = vmatprep.subr.mxu0 0.0
  %975 = vmatpush2.msra.mxu0 0.0
  %976 = vmatprep.subr.mxu0 0.0
  %977 = vmatpush2.msra.mxu0 0.0
  %978 = vmatprep.subr.mxu0 0.0
  %979 = vmatpush2.msra.mxu0 0.0
  %980 = vmatprep.subr.mxu0 0.0
  %981 = vmatpush2.msra.mxu0 0.0
  %982 = vmatprep.subr.mxu0 0.0
  %983 = vmatpush2.msra.mxu0 0.0
  %984 = vmatprep.subr.mxu0 0.0
  %985 = vmatpush2.msra.mxu0 0.0
  %986 = vmatprep.subr.mxu0 0.0
  %987 = vmatpush2.msra.mxu0 0.0
  %988 = vmatprep.subr.mxu0 0.0
  %989 = vmatpush2.msra.mxu0 0.0
  %990 = vmatprep.mubr.f32.mxu0 0.0
  %991 = vmatmul.mubr.f32.gmra.mxu0 %v828
  %v992 = vpop.f32.mrf.mxu0
  %v993 = vadd.f32 %v825, %v992
  %v994 = vpop.f32.mrf.mxu0
  %995 = vmatprep.mubr.f32.mxu0 0.0
  %996 = vmatmul.mubr.f32.gmra.mxu0 %v831
  %v997 = vpop.f32.mrf.mxu0
  %v998 = vadd.f32 %v825, %v997
  %v999 = vpop.f32.mrf.mxu0
  %1000 = vmatprep.mubr.f32.mxu0 0.0
  %1001 = vmatmul.mubr.f32.gmra.mxu0 %v834
  %v1002 = vpop.f32.mrf.mxu0
  %v1003 = vadd.f32 %v825, %v1002
  %v1004 = vpop.f32.mrf.mxu0
  %1005 = vmatprep.mubr.f32.mxu0 0.0
  %1006 = vmatmul.mubr.f32.gmra.mxu0 %v837
  %v1007 = vpop.f32.mrf.mxu0
  %v1008 = vadd.f32 %v825, %v1007
  %v1009 = vpop.f32.mrf.mxu0
  %1010 = vmatprep.mubr.f32.mxu0 0.0
  %1011 = vmatmul.mubr.f32.gmra.mxu0 %v840
  %v1012 = vpop.f32.mrf.mxu0
  %v1013 = vadd.f32 %v825, %v1012
  %v1014 = vpop.f32.mrf.mxu0
  %1015 = vmatprep.mubr.f32.mxu0 0.0
  %1016 = vmatmul.mubr.f32.gmra.mxu0 %v843
  %v1017 = vpop.f32.mrf.mxu0
  %v1018 = vadd.f32 %v825, %v1017
  %v1019 = vpop.f32.mrf.mxu0
  %1020 = vmatprep.mubr.f32.mxu0 0.0
  %1021 = vmatmul.mubr.f32.gmra.mxu0 %v846
  %v1022 = vpop.f32.mrf.mxu0
  %v1023 = vadd.f32 %v825, %v1022
  %v1024 = vpop.f32.mrf.mxu0
  %1025 = vmatprep.mubr.f32.mxu0 0.0
  %1026 = vmatmul.mubr.f32.gmra.mxu0 %v849
  %v1027 = vpop.f32.mrf.mxu0
  %v1028 = vadd.f32 %v825, %v1027
  %v1029 = vpop.f32.mrf.mxu0
  %1030 = vmatprep.mubr.f32.mxu0 0.0
  %1031 = vmatmul.mubr.f32.gmra.mxu0 %v852
  %v1032 = vpop.f32.mrf.mxu0
  %v1033 = vadd.f32 %v825, %v1032
  %v1034 = vpop.f32.mrf.mxu0
  %1035 = vmatprep.mubr.f32.mxu0 0.0
  %1036 = vmatmul.mubr.f32.gmra.mxu0 %v855
  %v1037 = vpop.f32.mrf.mxu0
  %v1038 = vadd.f32 %v825, %v1037
  %v1039 = vpop.f32.mrf.mxu0
  %1040 = vmatprep.mubr.f32.mxu0 0.0
  %1041 = vmatmul.mubr.f32.gmra.mxu0 %v858
  %v1042 = vpop.f32.mrf.mxu0
  %v1043 = vadd.f32 %v825, %v1042
  %v1044 = vpop.f32.mrf.mxu0
  %1045 = vmatprep.mubr.f32.mxu0 0.0
  %1046 = vmatmul.mubr.f32.gmra.mxu0 %v861
  %v1047 = vpop.f32.mrf.mxu0
  %v1048 = vadd.f32 %v825, %v1047
  %v1049 = vpop.f32.mrf.mxu0
  %1050 = vmatprep.mubr.f32.mxu0 0.0
  %1051 = vmatmul.mubr.f32.gmra.mxu0 %v864
  %v1052 = vpop.f32.mrf.mxu0
  %v1053 = vadd.f32 %v825, %v1052
  %v1054 = vpop.f32.mrf.mxu0
  %1055 = vmatprep.mubr.f32.mxu0 0.0
  %1056 = vmatmul.mubr.f32.gmra.mxu0 %v867
  %v1057 = vpop.f32.mrf.mxu0
  %v1058 = vadd.f32 %v825, %v1057
  %v1059 = vpop.f32.mrf.mxu0
  %1060 = vmatprep.mubr.f32.mxu0 0.0
  %1061 = vmatmul.mubr.f32.gmra.mxu0 %v870
  %v1062 = vpop.f32.mrf.mxu0
  %v1063 = vadd.f32 %v825, %v1062
  %v1064 = vpop.f32.mrf.mxu0
  %1065 = vmatprep.mubr.f32.mxu0 0.0
  %1066 = vmatmul.mubr.f32.gmra.mxu0 %v873
  %v1067 = vpop.f32.mrf.mxu0
  %v1068 = vadd.f32 %v825, %v1067
  %v1069 = vpop.f32.mrf.mxu0
  %1070 = vmatprep.mubr.f32.mxu0 0.0
  %1071 = vmatmul.mubr.f32.gmra.mxu0 %v876
  %v1072 = vpop.f32.mrf.mxu0
  %v1073 = vadd.f32 %v825, %v1072
  %v1074 = vpop.f32.mrf.mxu0
  %1075 = vmatprep.mubr.f32.mxu0 0.0
  %1076 = vmatmul.mubr.f32.gmra.mxu0 %v879
  %v1077 = vpop.f32.mrf.mxu0
  %v1078 = vadd.f32 %v825, %v1077
  %v1079 = vpop.f32.mrf.mxu0
  %1080 = vmatprep.mubr.f32.mxu0 0.0
  %1081 = vmatmul.mubr.f32.gmra.mxu0 %v882
  %v1082 = vpop.f32.mrf.mxu0
  %v1083 = vadd.f32 %v825, %v1082
  %v1084 = vpop.f32.mrf.mxu0
  %1085 = vmatprep.mubr.f32.mxu0 0.0
  %1086 = vmatmul.mubr.f32.gmra.mxu0 %v885
  %v1087 = vpop.f32.mrf.mxu0
  %v1088 = vadd.f32 %v825, %v1087
  %v1089 = vpop.f32.mrf.mxu0
  %1090 = vmatprep.mubr.f32.mxu0 0.0
  %1091 = vmatmul.mubr.f32.gmra.mxu0 %v888
  %v1092 = vpop.f32.mrf.mxu0
  %v1093 = vadd.f32 %v825, %v1092
  %v1094 = vpop.f32.mrf.mxu0
  %1095 = vmatprep.mubr.f32.mxu0 0.0
  %1096 = vmatmul.mubr.f32.gmra.mxu0 %v891
  %v1097 = vpop.f32.mrf.mxu0
  %v1098 = vadd.f32 %v825, %v1097
  %v1099 = vpop.f32.mrf.mxu0
  %1100 = vmatprep.mubr.f32.mxu0 0.0
  %1101 = vmatmul.mubr.f32.gmra.mxu0 %v894
  %v1102 = vpop.f32.mrf.mxu0
  %v1103 = vadd.f32 %v825, %v1102
  %v1104 = vpop.f32.mrf.mxu0
  %1105 = vmatprep.mubr.f32.mxu0 0.0
  %1106 = vmatmul.mubr.f32.gmra.mxu0 %v897
  %v1107 = vpop.f32.mrf.mxu0
  %v1108 = vadd.f32 %v825, %v1107
  %v1109 = vpop.f32.mrf.mxu0
  %1110 = vmatprep.mubr.f32.mxu0 0.0
  %1111 = vmatmul.mubr.f32.gmra.mxu0 %v900
  %v1112 = vpop.f32.mrf.mxu0
  %v1113 = vadd.f32 %v825, %v1112
  %v1114 = vpop.f32.mrf.mxu0
  %1115 = vmatprep.mubr.f32.mxu0 0.0
  %1116 = vmatmul.mubr.f32.gmra.mxu0 %v903
  %v1117 = vpop.f32.mrf.mxu0
  %v1118 = vadd.f32 %v825, %v1117
  %v1119 = vpop.f32.mrf.mxu0
  %1120 = vmatprep.mubr.f32.mxu0 0.0
  %1121 = vmatmul.mubr.f32.gmra.mxu0 %v906
  %v1122 = vpop.f32.mrf.mxu0
  %v1123 = vadd.f32 %v825, %v1122
  %v1124 = vpop.f32.mrf.mxu0
  %1125 = vmatprep.mubr.f32.mxu0 0.0
  %1126 = vmatmul.mubr.f32.gmra.mxu0 %v909
  %v1127 = vpop.f32.mrf.mxu0
  %v1128 = vadd.f32 %v825, %v1127
  %v1129 = vpop.f32.mrf.mxu0
  %1130 = vmatprep.mubr.f32.mxu0 0.0
  %1131 = vmatmul.mubr.f32.gmra.mxu0 %v912
  %v1132 = vpop.f32.mrf.mxu0
  %v1133 = vadd.f32 %v825, %v1132
  %v1134 = vpop.f32.mrf.mxu0
  %1135 = vmatprep.mubr.f32.mxu0 0.0
  %1136 = vmatmul.mubr.f32.gmra.mxu0 %v915
  %v1137 = vpop.f32.mrf.mxu0
  %v1138 = vadd.f32 %v825, %v1137
  %v1139 = vpop.f32.mrf.mxu0
  %1140 = vmatprep.mubr.f32.mxu0 0.0
  %1141 = vmatmul.mubr.f32.gmra.mxu0 %v918
  %v1142 = vpop.f32.mrf.mxu0
  %v1143 = vadd.f32 %v825, %v1142
  %v1144 = vpop.f32.mrf.mxu0
  %1145 = vmatprep.mubr.f32.mxu0 0.0
  %1146 = vmatmul.mubr.f32.gmra.mxu0 %v921
  %v1147 = vpop.f32.mrf.mxu0
  %v1148 = vadd.f32 %v825, %v1147
  %v1149 = vpop.f32.mrf.mxu0
  %1150 = vdwg.mxu0
  %v1151 = vmax.f32 %v993, 0.0
  %v1152 = vmax.f32 %v998, 0.0
  %v1153 = vmax.f32 %v1003, 0.0
  %v1154 = vmax.f32 %v1008, 0.0
  %v1155 = vmax.f32 %v1013, 0.0
  %v1156 = vmax.f32 %v1018, 0.0
  %v1157 = vmax.f32 %v1023, 0.0
  %v1158 = vmax.f32 %v1028, 0.0
  %v1159 = vmax.f32 %v1033, 0.0
  %v1160 = vmax.f32 %v1038, 0.0
  %v1161 = vmax.f32 %v1043, 0.0
  %v1162 = vmax.f32 %v1048, 0.0
  %v1163 = vmax.f32 %v1053, 0.0
  %v1164 = vmax.f32 %v1058, 0.0
  %v1165 = vmax.f32 %v1063, 0.0
  %v1166 = vmax.f32 %v1068, 0.0
  %v1167 = vmax.f32 %v1073, 0.0
  %v1168 = vmax.f32 %v1078, 0.0
  %v1169 = vmax.f32 %v1083, 0.0
  %v1170 = vmax.f32 %v1088, 0.0
  %v1171 = vmax.f32 %v1093, 0.0
  %v1172 = vmax.f32 %v1098, 0.0
  %v1173 = vmax.f32 %v1103, 0.0
  %v1174 = vmax.f32 %v1108, 0.0
  %v1175 = vmax.f32 %v1113, 0.0
  %v1176 = vmax.f32 %v1118, 0.0
  %v1177 = vmax.f32 %v1123, 0.0
  %v1178 = vmax.f32 %v1128, 0.0
  %v1179 = vmax.f32 %v1133, 0.0
  %v1180 = vmax.f32 %v1138, 0.0
  %v1181 = vmax.f32 %v1143, 0.0
  %v1182 = vmax.f32 %v1148, 0.0
  %s1183 = scalar_lea.vmem %s3, 16
  %v1184 = vld [vmem:[%s1183] sm:$0xff]
  %v1185 = vld [vmem:[%s1183 + $0x8] sm:$0xf]
  %v1187 = vsel %vm61, %v1151, 0
  %v1190 = vsel %vm61, %v1152, 0
  %v1193 = vsel %vm61, %v1153, 0
  %v1196 = vsel %vm61, %v1154, 0
  %v1199 = vsel %vm61, %v1155, 0
  %v1202 = vsel %vm61, %v1156, 0
  %v1205 = vsel %vm61, %v1157, 0
  %v1208 = vsel %vm61, %v1158, 0
  %v1211 = vsel %vm61, %v1159, 0
  %v1214 = vsel %vm61, %v1160, 0
  %v1217 = vsel %vm61, %v1161, 0
  %v1220 = vsel %vm61, %v1162, 0
  %v1223 = vsel %vm61, %v1163, 0
  %v1226 = vsel %vm61, %v1164, 0
  %v1229 = vsel %vm61, %v1165, 0
  %v1232 = vsel %vm61, %v1166, 0
  %v1235 = vsel %vm61, %v1167, 0
  %v1238 = vsel %vm61, %v1168, 0
  %v1241 = vsel %vm61, %v1169, 0
  %v1244 = vsel %vm61, %v1170, 0
  %v1247 = vsel %vm61, %v1171, 0
  %v1250 = vsel %vm61, %v1172, 0
  %v1253 = vsel %vm61, %v1173, 0
  %v1256 = vsel %vm61, %v1174, 0
  %v1259 = vsel %vm61, %v1175, 0
  %v1262 = vsel %vm61, %v1176, 0
  %v1265 = vsel %vm61, %v1177, 0
  %v1268 = vsel %vm61, %v1178, 0
  %v1271 = vsel %vm61, %v1179, 0
  %v1274 = vsel %vm61, %v1180, 0
  %v1277 = vsel %vm61, %v1181, 0
  %v1280 = vsel %vm61, %v1182, 0
  %v1283 = vsel %vm158, %v1185, 0
  %1285 = vmatprep.subr.mxu0 0.0
  %1286 = vmatpush1.msra.mxu0 0.0
  %1287 = vmatprep.subr.mxu0 0.0
  %1288 = vmatpush1.msra.mxu0 0.0
  %1289 = vmatprep.subr.mxu0 0.0
  %1290 = vmatpush1.msra.mxu0 0.0
  %1291 = vmatprep.subr.mxu0 0.0
  %1292 = vmatpush1.msra.mxu0 0.0
  %1293 = vmatprep.subr.mxu0 0.0
  %1294 = vmatpush1.msra.mxu0 0.0
  %1295 = vmatprep.subr.mxu0 0.0
  %1296 = vmatpush1.msra.mxu0 0.0
  %1297 = vmatprep.subr.mxu0 0.0
  %1298 = vmatpush1.msra.mxu0 0.0
  %1299 = vmatprep.subr.mxu0 0.0
  %1300 = vmatpush1.msra.mxu0 0.0
  %1301 = vmatprep.subr.mxu0 0.0
  %1302 = vmatpush1.msra.mxu0 0.0
  %1303 = vmatprep.subr.mxu0 0.0
  %1304 = vmatpush1.msra.mxu0 0.0
  %1305 = vmatprep.subr.mxu0 0.0
  %1306 = vmatpush1.msra.mxu0 0.0
  %1307 = vmatprep.subr.mxu0 0.0
  %1308 = vmatpush1.msra.mxu0 0.0
  %1309 = vmatprep.subr.mxu0 0.0
  %1310 = vmatpush1.msra.mxu0 0.0
  %1311 = vmatprep.subr.mxu0 0.0
  %1312 = vmatpush1.msra.mxu0 0.0
  %1313 = vmatprep.subr.mxu0 0.0
  %1314 = vmatpush1.msra.mxu0 %v1283
  %1315 = vmatprep.subr.mxu0 0.0
  %1316 = vmatpush1.msra.mxu0 %v1184
  %1317 = vmatprep.subr.mxu0 0.0
  %1318 = vmatpush2.msra.mxu0 0.0
  %1319 = vmatprep.subr.mxu0 0.0
  %1320 = vmatpush2.msra.mxu0 0.0
  %1321 = vmatprep.subr.mxu0 0.0
  %1322 = vmatpush2.msra.mxu0 0.0
  %1323 = vmatprep.subr.mxu0 0.0
  %1324 = vmatpush2.msra.mxu0 0.0
  %1325 = vmatprep.subr.mxu0 0.0
  %1326 = vmatpush2.msra.mxu0 0.0
  %1327 = vmatprep.subr.mxu0 0.0
  %1328 = vmatpush2.msra.mxu0 0.0
  %1329 = vmatprep.subr.mxu0 0.0
  %1330 = vmatpush2.msra.mxu0 0.0
  %1331 = vmatprep.subr.mxu0 0.0
  %1332 = vmatpush2.msra.mxu0 0.0
  %1333 = vmatprep.subr.mxu0 0.0
  %1334 = vmatpush2.msra.mxu0 0.0
  %1335 = vmatprep.subr.mxu0 0.0
  %1336 = vmatpush2.msra.mxu0 0.0
  %1337 = vmatprep.subr.mxu0 0.0
  %1338 = vmatpush2.msra.mxu0 0.0
  %1339 = vmatprep.subr.mxu0 0.0
  %1340 = vmatpush2.msra.mxu0 0.0
  %1341 = vmatprep.subr.mxu0 0.0
  %1342 = vmatpush2.msra.mxu0 0.0
  %1343 = vmatprep.subr.mxu0 0.0
  %1344 = vmatpush2.msra.mxu0 0.0
  %1345 = vmatprep.subr.mxu0 0.0
  %1346 = vmatpush2.msra.mxu0 0.0
  %1347 = vmatprep.subr.mxu0 0.0
  %1348 = vmatpush2.msra.mxu0 0.0
  %1349 = vmatprep.mubr.f32.mxu0 0.0
  %1350 = vmatmul.mubr.f32.gmra.mxu0 %v1187
  %v1351 = vpop.f32.mrf.mxu0
  %v1352 = vadd.f32 0.0, %v1351
  %v1353 = vpop.f32.mrf.mxu0
  %1354 = vmatprep.mubr.f32.mxu0 0.0
  %1355 = vmatmul.mubr.f32.gmra.mxu0 %v1190
  %v1356 = vpop.f32.mrf.mxu0
  %v1357 = vadd.f32 0.0, %v1356
  %v1358 = vpop.f32.mrf.mxu0
  %1359 = vmatprep.mubr.f32.mxu0 0.0
  %1360 = vmatmul.mubr.f32.gmra.mxu0 %v1193
  %v1361 = vpop.f32.mrf.mxu0
  %v1362 = vadd.f32 0.0, %v1361
  %v1363 = vpop.f32.mrf.mxu0
  %1364 = vmatprep.mubr.f32.mxu0 0.0
  %1365 = vmatmul.mubr.f32.gmra.mxu0 %v1196
  %v1366 = vpop.f32.mrf.mxu0
  %v1367 = vadd.f32 0.0, %v1366
  %v1368 = vpop.f32.mrf.mxu0
  %1369 = vmatprep.mubr.f32.mxu0 0.0
  %1370 = vmatmul.mubr.f32.gmra.mxu0 %v1199
  %v1371 = vpop.f32.mrf.mxu0
  %v1372 = vadd.f32 0.0, %v1371
  %v1373 = vpop.f32.mrf.mxu0
  %1374 = vmatprep.mubr.f32.mxu0 0.0
  %1375 = vmatmul.mubr.f32.gmra.mxu0 %v1202
  %v1376 = vpop.f32.mrf.mxu0
  %v1377 = vadd.f32 0.0, %v1376
  %v1378 = vpop.f32.mrf.mxu0
  %1379 = vmatprep.mubr.f32.mxu0 0.0
  %1380 = vmatmul.mubr.f32.gmra.mxu0 %v1205
  %v1381 = vpop.f32.mrf.mxu0
  %v1382 = vadd.f32 0.0, %v1381
  %v1383 = vpop.f32.mrf.mxu0
  %1384 = vmatprep.mubr.f32.mxu0 0.0
  %1385 = vmatmul.mubr.f32.gmra.mxu0 %v1208
  %v1386 = vpop.f32.mrf.mxu0
  %v1387 = vadd.f32 0.0, %v1386
  %v1388 = vpop.f32.mrf.mxu0
  %1389 = vmatprep.mubr.f32.mxu0 0.0
  %1390 = vmatmul.mubr.f32.gmra.mxu0 %v1211
  %v1391 = vpop.f32.mrf.mxu0
  %v1392 = vadd.f32 0.0, %v1391
  %v1393 = vpop.f32.mrf.mxu0
  %1394 = vmatprep.mubr.f32.mxu0 0.0
  %1395 = vmatmul.mubr.f32.gmra.mxu0 %v1214
  %v1396 = vpop.f32.mrf.mxu0
  %v1397 = vadd.f32 0.0, %v1396
  %v1398 = vpop.f32.mrf.mxu0
  %1399 = vmatprep.mubr.f32.mxu0 0.0
  %1400 = vmatmul.mubr.f32.gmra.mxu0 %v1217
  %v1401 = vpop.f32.mrf.mxu0
  %v1402 = vadd.f32 0.0, %v1401
  %v1403 = vpop.f32.mrf.mxu0
  %1404 = vmatprep.mubr.f32.mxu0 0.0
  %1405 = vmatmul.mubr.f32.gmra.mxu0 %v1220
  %v1406 = vpop.f32.mrf.mxu0
  %v1407 = vadd.f32 0.0, %v1406
  %v1408 = vpop.f32.mrf.mxu0
  %1409 = vmatprep.mubr.f32.mxu0 0.0
  %1410 = vmatmul.mubr.f32.gmra.mxu0 %v1223
  %v1411 = vpop.f32.mrf.mxu0
  %v1412 = vadd.f32 0.0, %v1411
  %v1413 = vpop.f32.mrf.mxu0
  %1414 = vmatprep.mubr.f32.mxu0 0.0
  %1415 = vmatmul.mubr.f32.gmra.mxu0 %v1226
  %v1416 = vpop.f32.mrf.mxu0
  %v1417 = vadd.f32 0.0, %v1416
  %v1418 = vpop.f32.mrf.mxu0
  %1419 = vmatprep.mubr.f32.mxu0 0.0
  %1420 = vmatmul.mubr.f32.gmra.mxu0 %v1229
  %v1421 = vpop.f32.mrf.mxu0
  %v1422 = vadd.f32 0.0, %v1421
  %v1423 = vpop.f32.mrf.mxu0
  %1424 = vmatprep.mubr.f32.mxu0 0.0
  %1425 = vmatmul.mubr.f32.gmra.mxu0 %v1232
  %v1426 = vpop.f32.mrf.mxu0
  %v1427 = vadd.f32 0.0, %v1426
  %v1428 = vpop.f32.mrf.mxu0
  %1429 = vmatprep.mubr.f32.mxu0 0.0
  %1430 = vmatmul.mubr.f32.gmra.mxu0 %v1235
  %v1431 = vpop.f32.mrf.mxu0
  %v1432 = vadd.f32 0.0, %v1431
  %v1433 = vpop.f32.mrf.mxu0
  %1434 = vmatprep.mubr.f32.mxu0 0.0
  %1435 = vmatmul.mubr.f32.gmra.mxu0 %v1238
  %v1436 = vpop.f32.mrf.mxu0
  %v1437 = vadd.f32 0.0, %v1436
  %v1438 = vpop.f32.mrf.mxu0
  %1439 = vmatprep.mubr.f32.mxu0 0.0
  %1440 = vmatmul.mubr.f32.gmra.mxu0 %v1241
  %v1441 = vpop.f32.mrf.mxu0
  %v1442 = vadd.f32 0.0, %v1441
  %v1443 = vpop.f32.mrf.mxu0
  %1444 = vmatprep.mubr.f32.mxu0 0.0
  %1445 = vmatmul.mubr.f32.gmra.mxu0 %v1244
  %v1446 = vpop.f32.mrf.mxu0
  %v1447 = vadd.f32 0.0, %v1446
  %v1448 = vpop.f32.mrf.mxu0
  %1449 = vmatprep.mubr.f32.mxu0 0.0
  %1450 = vmatmul.mubr.f32.gmra.mxu0 %v1247
  %v1451 = vpop.f32.mrf.mxu0
  %v1452 = vadd.f32 0.0, %v1451
  %v1453 = vpop.f32.mrf.mxu0
  %1454 = vmatprep.mubr.f32.mxu0 0.0
  %1455 = vmatmul.mubr.f32.gmra.mxu0 %v1250
  %v1456 = vpop.f32.mrf.mxu0
  %v1457 = vadd.f32 0.0, %v1456
  %v1458 = vpop.f32.mrf.mxu0
  %1459 = vmatprep.mubr.f32.mxu0 0.0
  %1460 = vmatmul.mubr.f32.gmra.mxu0 %v1253
  %v1461 = vpop.f32.mrf.mxu0
  %v1462 = vadd.f32 0.0, %v1461
  %v1463 = vpop.f32.mrf.mxu0
  %1464 = vmatprep.mubr.f32.mxu0 0.0
  %1465 = vmatmul.mubr.f32.gmra.mxu0 %v1256
  %v1466 = vpop.f32.mrf.mxu0
  %v1467 = vadd.f32 0.0, %v1466
  %v1468 = vpop.f32.mrf.mxu0
  %1469 = vmatprep.mubr.f32.mxu0 0.0
  %1470 = vmatmul.mubr.f32.gmra.mxu0 %v1259
  %v1471 = vpop.f32.mrf.mxu0
  %v1472 = vadd.f32 0.0, %v1471
  %v1473 = vpop.f32.mrf.mxu0
  %1474 = vmatprep.mubr.f32.mxu0 0.0
  %1475 = vmatmul.mubr.f32.gmra.mxu0 %v1262
  %v1476 = vpop.f32.mrf.mxu0
  %v1477 = vadd.f32 0.0, %v1476
  %v1478 = vpop.f32.mrf.mxu0
  %1479 = vmatprep.mubr.f32.mxu0 0.0
  %1480 = vmatmul.mubr.f32.gmra.mxu0 %v1265
  %v1481 = vpop.f32.mrf.mxu0
  %v1482 = vadd.f32 0.0, %v1481
  %v1483 = vpop.f32.mrf.mxu0
  %1484 = vmatprep.mubr.f32.mxu0 0.0
  %1485 = vmatmul.mubr.f32.gmra.mxu0 %v1268
  %v1486 = vpop.f32.mrf.mxu0
  %v1487 = vadd.f32 0.0, %v1486
  %v1488 = vpop.f32.mrf.mxu0
  %1489 = vmatprep.mubr.f32.mxu0 0.0
  %1490 = vmatmul.mubr.f32.gmra.mxu0 %v1271
  %v1491 = vpop.f32.mrf.mxu0
  %v1492 = vadd.f32 0.0, %v1491
  %v1493 = vpop.f32.mrf.mxu0
  %1494 = vmatprep.mubr.f32.mxu0 0.0
  %1495 = vmatmul.mubr.f32.gmra.mxu0 %v1274
  %v1496 = vpop.f32.mrf.mxu0
  %v1497 = vadd.f32 0.0, %v1496
  %v1498 = vpop.f32.mrf.mxu0
  %1499 = vmatprep.mubr.f32.mxu0 0.0
  %1500 = vmatmul.mubr.f32.gmra.mxu0 %v1277
  %v1501 = vpop.f32.mrf.mxu0
  %v1502 = vadd.f32 0.0, %v1501
  %v1503 = vpop.f32.mrf.mxu0
  %1504 = vmatprep.mubr.f32.mxu0 0.0
  %1505 = vmatmul.mubr.f32.gmra.mxu0 %v1280
  %v1506 = vpop.f32.mrf.mxu0
  %v1507 = vadd.f32 0.0, %v1506
  %v1508 = vpop.f32.mrf.mxu0
  %1509 = vdwg.mxu0
  %v1510 = vadd.f32 %v784, %v1352
  %v1511 = vadd.f32 %v785, %v1357
  %v1512 = vadd.f32 %v786, %v1362
  %v1513 = vadd.f32 %v787, %v1367
  %v1514 = vadd.f32 %v788, %v1372
  %v1515 = vadd.f32 %v789, %v1377
  %v1516 = vadd.f32 %v790, %v1382
  %v1517 = vadd.f32 %v791, %v1387
  %v1518 = vadd.f32 %v792, %v1392
  %v1519 = vadd.f32 %v793, %v1397
  %v1520 = vadd.f32 %v794, %v1402
  %v1521 = vadd.f32 %v795, %v1407
  %v1522 = vadd.f32 %v796, %v1412
  %v1523 = vadd.f32 %v797, %v1417
  %v1524 = vadd.f32 %v798, %v1422
  %v1525 = vadd.f32 %v799, %v1427
  %v1526 = vadd.f32 %v800, %v1432
  %v1527 = vadd.f32 %v801, %v1437
  %v1528 = vadd.f32 %v802, %v1442
  %v1529 = vadd.f32 %v803, %v1447
  %v1530 = vadd.f32 %v804, %v1452
  %v1531 = vadd.f32 %v805, %v1457
  %v1532 = vadd.f32 %v806, %v1462
  %v1533 = vadd.f32 %v807, %v1467
  %v1534 = vadd.f32 %v808, %v1472
  %v1535 = vadd.f32 %v809, %v1477
  %v1536 = vadd.f32 %v810, %v1482
  %v1537 = vadd.f32 %v811, %v1487
  %v1538 = vadd.f32 %v812, %v1492
  %v1539 = vadd.f32 %v813, %v1497
  %v1540 = vadd.f32 %v814, %v1502
  %v1541 = vadd.f32 %v815, %v1507
  %s1542 = scalar_lea.vmem %s4, 1
  %v1543 = vld [vmem:[%s1542] sm:$0x1]
  %v1545 = vlaneseq
  %v1546 = vshrl.u32 %v1545, 7
  %v1547 = vsub.s32 0, %v1546
  %v1548 = vrot.slane %v1543, %v1547
  %v1550 = vadd.f32 %v1510, %v1548
  %v1551 = vadd.f32 %v1511, %v1548
  %v1552 = vadd.f32 %v1512, %v1548
  %v1553 = vadd.f32 %v1513, %v1548
  %v1554 = vadd.f32 %v1514, %v1548
  %v1555 = vadd.f32 %v1515, %v1548
  %v1556 = vadd.f32 %v1516, %v1548
  %v1557 = vadd.f32 %v1517, %v1548
  %v1558 = vadd.f32 %v1518, %v1548
  %v1559 = vadd.f32 %v1519, %v1548
  %v1560 = vadd.f32 %v1520, %v1548
  %v1561 = vadd.f32 %v1521, %v1548
  %v1562 = vadd.f32 %v1522, %v1548
  %v1563 = vadd.f32 %v1523, %v1548
  %v1564 = vadd.f32 %v1524, %v1548
  %v1565 = vadd.f32 %v1525, %v1548
  %v1566 = vadd.f32 %v1526, %v1548
  %v1567 = vadd.f32 %v1527, %v1548
  %v1568 = vadd.f32 %v1528, %v1548
  %v1569 = vadd.f32 %v1529, %v1548
  %v1570 = vadd.f32 %v1530, %v1548
  %v1571 = vadd.f32 %v1531, %v1548
  %v1572 = vadd.f32 %v1532, %v1548
  %v1573 = vadd.f32 %v1533, %v1548
  %v1574 = vadd.f32 %v1534, %v1548
  %v1575 = vadd.f32 %v1535, %v1548
  %v1576 = vadd.f32 %v1536, %v1548
  %v1577 = vadd.f32 %v1537, %v1548
  %v1578 = vadd.f32 %v1538, %v1548
  %v1579 = vadd.f32 %v1539, %v1548
  %v1580 = vadd.f32 %v1540, %v1548
  %v1581 = vadd.f32 %v1541, %v1548
  %v1582 = vadd.f32 %v1550, %v20
  %v1583 = vadd.f32 %v1551, %v21
  %v1584 = vadd.f32 %v1552, %v22
  %v1585 = vadd.f32 %v1553, %v23
  %v1586 = vadd.f32 %v1554, %v24
  %v1587 = vadd.f32 %v1555, %v25
  %v1588 = vadd.f32 %v1556, %v26
  %v1589 = vadd.f32 %v1557, %v27
  %v1590 = vadd.f32 %v1558, %v28
  %v1591 = vadd.f32 %v1559, %v29
  %v1592 = vadd.f32 %v1560, %v30
  %v1593 = vadd.f32 %v1561, %v31
  %v1594 = vadd.f32 %v1562, %v32
  %v1595 = vadd.f32 %v1563, %v33
  %v1596 = vadd.f32 %v1564, %v34
  %v1597 = vadd.f32 %v1565, %v35
  %v1598 = vadd.f32 %v1566, %v36
  %v1599 = vadd.f32 %v1567, %v37
  %v1600 = vadd.f32 %v1568, %v38
  %v1601 = vadd.f32 %v1569, %v39
  %v1602 = vadd.f32 %v1570, %v40
  %v1603 = vadd.f32 %v1571, %v41
  %v1604 = vadd.f32 %v1572, %v42
  %v1605 = vadd.f32 %v1573, %v43
  %v1606 = vadd.f32 %v1574, %v44
  %v1607 = vadd.f32 %v1575, %v45
  %v1608 = vadd.f32 %v1576, %v46
  %v1609 = vadd.f32 %v1577, %v47
  %v1610 = vadd.f32 %v1578, %v48
  %v1611 = vadd.f32 %v1579, %v49
  %v1612 = vadd.f32 %v1580, %v50
  %v1613 = vadd.f32 %v1581, %v51
  %v1614 = vsel %vm61, %v1582, 0.0
  %1615 = vadd.xlane.f32.xlu0 %v1614
  %v1616 = vpop.xlane.xlu0 %1615
  %v1617 = vsel %vm61, %v1583, 0.0
  %1618 = vadd.xlane.f32.xlu0 %v1617
  %v1619 = vpop.xlane.xlu0 %1618
  %v1620 = vsel %vm61, %v1584, 0.0
  %1621 = vadd.xlane.f32.xlu0 %v1620
  %v1622 = vpop.xlane.xlu0 %1621
  %v1623 = vsel %vm61, %v1585, 0.0
  %1624 = vadd.xlane.f32.xlu0 %v1623
  %v1625 = vpop.xlane.xlu0 %1624
  %v1626 = vsel %vm61, %v1586, 0.0
  %1627 = vadd.xlane.f32.xlu0 %v1626
  %v1628 = vpop.xlane.xlu0 %1627
  %v1629 = vsel %vm61, %v1587, 0.0
  %1630 = vadd.xlane.f32.xlu0 %v1629
  %v1631 = vpop.xlane.xlu0 %1630
  %v1632 = vsel %vm61, %v1588, 0.0
  %1633 = vadd.xlane.f32.xlu0 %v1632
  %v1634 = vpop.xlane.xlu0 %1633
  %v1635 = vsel %vm61, %v1589, 0.0
  %1636 = vadd.xlane.f32.xlu0 %v1635
  %v1637 = vpop.xlane.xlu0 %1636
  %v1638 = vsel %vm61, %v1590, 0.0
  %1639 = vadd.xlane.f32.xlu0 %v1638
  %v1640 = vpop.xlane.xlu0 %1639
  %v1641 = vsel %vm61, %v1591, 0.0
  %1642 = vadd.xlane.f32.xlu0 %v1641
  %v1643 = vpop.xlane.xlu0 %1642
  %v1644 = vsel %vm61, %v1592, 0.0
  %1645 = vadd.xlane.f32.xlu0 %v1644
  %v1646 = vpop.xlane.xlu0 %1645
  %v1647 = vsel %vm61, %v1593, 0.0
  %1648 = vadd.xlane.f32.xlu0 %v1647
  %v1649 = vpop.xlane.xlu0 %1648
  %v1650 = vsel %vm61, %v1594, 0.0
  %1651 = vadd.xlane.f32.xlu0 %v1650
  %v1652 = vpop.xlane.xlu0 %1651
  %v1653 = vsel %vm61, %v1595, 0.0
  %1654 = vadd.xlane.f32.xlu0 %v1653
  %v1655 = vpop.xlane.xlu0 %1654
  %v1656 = vsel %vm61, %v1596, 0.0
  %1657 = vadd.xlane.f32.xlu0 %v1656
  %v1658 = vpop.xlane.xlu0 %1657
  %v1659 = vsel %vm61, %v1597, 0.0
  %1660 = vadd.xlane.f32.xlu0 %v1659
  %v1661 = vpop.xlane.xlu0 %1660
  %v1662 = vsel %vm61, %v1598, 0.0
  %1663 = vadd.xlane.f32.xlu0 %v1662
  %v1664 = vpop.xlane.xlu0 %1663
  %v1665 = vsel %vm61, %v1599, 0.0
  %1666 = vadd.xlane.f32.xlu0 %v1665
  %v1667 = vpop.xlane.xlu0 %1666
  %v1668 = vsel %vm61, %v1600, 0.0
  %1669 = vadd.xlane.f32.xlu0 %v1668
  %v1670 = vpop.xlane.xlu0 %1669
  %v1671 = vsel %vm61, %v1601, 0.0
  %1672 = vadd.xlane.f32.xlu0 %v1671
  %v1673 = vpop.xlane.xlu0 %1672
  %v1674 = vsel %vm61, %v1602, 0.0
  %1675 = vadd.xlane.f32.xlu0 %v1674
  %v1676 = vpop.xlane.xlu0 %1675
  %v1677 = vsel %vm61, %v1603, 0.0
  %1678 = vadd.xlane.f32.xlu0 %v1677
  %v1679 = vpop.xlane.xlu0 %1678
  %v1680 = vsel %vm61, %v1604, 0.0
  %1681 = vadd.xlane.f32.xlu0 %v1680
  %v1682 = vpop.xlane.xlu0 %1681
  %v1683 = vsel %vm61, %v1605, 0.0
  %1684 = vadd.xlane.f32.xlu0 %v1683
  %v1685 = vpop.xlane.xlu0 %1684
  %v1686 = vsel %vm61, %v1606, 0.0
  %1687 = vadd.xlane.f32.xlu0 %v1686
  %v1688 = vpop.xlane.xlu0 %1687
  %v1689 = vsel %vm61, %v1607, 0.0
  %1690 = vadd.xlane.f32.xlu0 %v1689
  %v1691 = vpop.xlane.xlu0 %1690
  %v1692 = vsel %vm61, %v1608, 0.0
  %1693 = vadd.xlane.f32.xlu0 %v1692
  %v1694 = vpop.xlane.xlu0 %1693
  %v1695 = vsel %vm61, %v1609, 0.0
  %1696 = vadd.xlane.f32.xlu0 %v1695
  %v1697 = vpop.xlane.xlu0 %1696
  %v1698 = vsel %vm61, %v1610, 0.0
  %1699 = vadd.xlane.f32.xlu0 %v1698
  %v1700 = vpop.xlane.xlu0 %1699
  %v1701 = vsel %vm61, %v1611, 0.0
  %1702 = vadd.xlane.f32.xlu0 %v1701
  %v1703 = vpop.xlane.xlu0 %1702
  %v1704 = vsel %vm61, %v1612, 0.0
  %1705 = vadd.xlane.f32.xlu0 %v1704
  %v1706 = vpop.xlane.xlu0 %1705
  %v1707 = vsel %vm61, %v1613, 0.0
  %1708 = vadd.xlane.f32.xlu0 %v1707
  %v1709 = vpop.xlane.xlu0 %1708
  %v1710 = vrcp.pop 12.0
  %v1711 = vmul.f32 %v1616, %v1710
  %v1712 = vmul.f32 %v1619, %v1710
  %v1713 = vmul.f32 %v1622, %v1710
  %v1714 = vmul.f32 %v1625, %v1710
  %v1715 = vmul.f32 %v1628, %v1710
  %v1716 = vmul.f32 %v1631, %v1710
  %v1717 = vmul.f32 %v1634, %v1710
  %v1718 = vmul.f32 %v1637, %v1710
  %v1719 = vmul.f32 %v1640, %v1710
  %v1720 = vmul.f32 %v1643, %v1710
  %v1721 = vmul.f32 %v1646, %v1710
  %v1722 = vmul.f32 %v1649, %v1710
  %v1723 = vmul.f32 %v1652, %v1710
  %v1724 = vmul.f32 %v1655, %v1710
  %v1725 = vmul.f32 %v1658, %v1710
  %v1726 = vmul.f32 %v1661, %v1710
  %v1727 = vmul.f32 %v1664, %v1710
  %v1728 = vmul.f32 %v1667, %v1710
  %v1729 = vmul.f32 %v1670, %v1710
  %v1730 = vmul.f32 %v1673, %v1710
  %v1731 = vmul.f32 %v1676, %v1710
  %v1732 = vmul.f32 %v1679, %v1710
  %v1733 = vmul.f32 %v1682, %v1710
  %v1734 = vmul.f32 %v1685, %v1710
  %v1735 = vmul.f32 %v1688, %v1710
  %v1736 = vmul.f32 %v1691, %v1710
  %v1737 = vmul.f32 %v1694, %v1710
  %v1738 = vmul.f32 %v1697, %v1710
  %v1739 = vmul.f32 %v1700, %v1710
  %v1740 = vmul.f32 %v1703, %v1710
  %v1741 = vmul.f32 %v1706, %v1710
  %v1742 = vmul.f32 %v1709, %v1710
  %v1743 = vsub.f32 %v1582, %v1711
  %v1744 = vsub.f32 %v1583, %v1712
  %v1745 = vsub.f32 %v1584, %v1713
  %v1746 = vsub.f32 %v1585, %v1714
  %v1747 = vsub.f32 %v1586, %v1715
  %v1748 = vsub.f32 %v1587, %v1716
  %v1749 = vsub.f32 %v1588, %v1717
  %v1750 = vsub.f32 %v1589, %v1718
  %v1751 = vsub.f32 %v1590, %v1719
  %v1752 = vsub.f32 %v1591, %v1720
  %v1753 = vsub.f32 %v1592, %v1721
  %v1754 = vsub.f32 %v1593, %v1722
  %v1755 = vsub.f32 %v1594, %v1723
  %v1756 = vsub.f32 %v1595, %v1724
  %v1757 = vsub.f32 %v1596, %v1725
  %v1758 = vsub.f32 %v1597, %v1726
  %v1759 = vsub.f32 %v1598, %v1727
  %v1760 = vsub.f32 %v1599, %v1728
  %v1761 = vsub.f32 %v1600, %v1729
  %v1762 = vsub.f32 %v1601, %v1730
  %v1763 = vsub.f32 %v1602, %v1731
  %v1764 = vsub.f32 %v1603, %v1732
  %v1765 = vsub.f32 %v1604, %v1733
  %v1766 = vsub.f32 %v1605, %v1734
  %v1767 = vsub.f32 %v1606, %v1735
  %v1768 = vsub.f32 %v1607, %v1736
  %v1769 = vsub.f32 %v1608, %v1737
  %v1770 = vsub.f32 %v1609, %v1738
  %v1771 = vsub.f32 %v1610, %v1739
  %v1772 = vsub.f32 %v1611, %v1740
  %v1773 = vsub.f32 %v1612, %v1741
  %v1774 = vsub.f32 %v1613, %v1742
  %v1775 = vmul.f32 %v1743, %v1743
  %v1776 = vmul.f32 %v1744, %v1744
  %v1777 = vmul.f32 %v1745, %v1745
  %v1778 = vmul.f32 %v1746, %v1746
  %v1779 = vmul.f32 %v1747, %v1747
  %v1780 = vmul.f32 %v1748, %v1748
  %v1781 = vmul.f32 %v1749, %v1749
  %v1782 = vmul.f32 %v1750, %v1750
  %v1783 = vmul.f32 %v1751, %v1751
  %v1784 = vmul.f32 %v1752, %v1752
  %v1785 = vmul.f32 %v1753, %v1753
  %v1786 = vmul.f32 %v1754, %v1754
  %v1787 = vmul.f32 %v1755, %v1755
  %v1788 = vmul.f32 %v1756, %v1756
  %v1789 = vmul.f32 %v1757, %v1757
  %v1790 = vmul.f32 %v1758, %v1758
  %v1791 = vmul.f32 %v1759, %v1759
  %v1792 = vmul.f32 %v1760, %v1760
  %v1793 = vmul.f32 %v1761, %v1761
  %v1794 = vmul.f32 %v1762, %v1762
  %v1795 = vmul.f32 %v1763, %v1763
  %v1796 = vmul.f32 %v1764, %v1764
  %v1797 = vmul.f32 %v1765, %v1765
  %v1798 = vmul.f32 %v1766, %v1766
  %v1799 = vmul.f32 %v1767, %v1767
  %v1800 = vmul.f32 %v1768, %v1768
  %v1801 = vmul.f32 %v1769, %v1769
  %v1802 = vmul.f32 %v1770, %v1770
  %v1803 = vmul.f32 %v1771, %v1771
  %v1804 = vmul.f32 %v1772, %v1772
  %v1805 = vmul.f32 %v1773, %v1773
  %v1806 = vmul.f32 %v1774, %v1774
  %v1807 = vsel %vm61, %v1775, 0.0
  %1808 = vadd.xlane.f32.xlu0 %v1807
  %v1809 = vpop.xlane.xlu0 %1808
  %v1810 = vsel %vm61, %v1776, 0.0
  %1811 = vadd.xlane.f32.xlu0 %v1810
  %v1812 = vpop.xlane.xlu0 %1811
  %v1813 = vsel %vm61, %v1777, 0.0
  %1814 = vadd.xlane.f32.xlu0 %v1813
  %v1815 = vpop.xlane.xlu0 %1814
  %v1816 = vsel %vm61, %v1778, 0.0
  %1817 = vadd.xlane.f32.xlu0 %v1816
  %v1818 = vpop.xlane.xlu0 %1817
  %v1819 = vsel %vm61, %v1779, 0.0
  %1820 = vadd.xlane.f32.xlu0 %v1819
  %v1821 = vpop.xlane.xlu0 %1820
  %v1822 = vsel %vm61, %v1780, 0.0
  %1823 = vadd.xlane.f32.xlu0 %v1822
  %v1824 = vpop.xlane.xlu0 %1823
  %v1825 = vsel %vm61, %v1781, 0.0
  %1826 = vadd.xlane.f32.xlu0 %v1825
  %v1827 = vpop.xlane.xlu0 %1826
  %v1828 = vsel %vm61, %v1782, 0.0
  %1829 = vadd.xlane.f32.xlu0 %v1828
  %v1830 = vpop.xlane.xlu0 %1829
  %v1831 = vsel %vm61, %v1783, 0.0
  %1832 = vadd.xlane.f32.xlu0 %v1831
  %v1833 = vpop.xlane.xlu0 %1832
  %v1834 = vsel %vm61, %v1784, 0.0
  %1835 = vadd.xlane.f32.xlu0 %v1834
  %v1836 = vpop.xlane.xlu0 %1835
  %v1837 = vsel %vm61, %v1785, 0.0
  %1838 = vadd.xlane.f32.xlu0 %v1837
  %v1839 = vpop.xlane.xlu0 %1838
  %v1840 = vsel %vm61, %v1786, 0.0
  %1841 = vadd.xlane.f32.xlu0 %v1840
  %v1842 = vpop.xlane.xlu0 %1841
  %v1843 = vsel %vm61, %v1787, 0.0
  %1844 = vadd.xlane.f32.xlu0 %v1843
  %v1845 = vpop.xlane.xlu0 %1844
  %v1846 = vsel %vm61, %v1788, 0.0
  %1847 = vadd.xlane.f32.xlu0 %v1846
  %v1848 = vpop.xlane.xlu0 %1847
  %v1849 = vsel %vm61, %v1789, 0.0
  %1850 = vadd.xlane.f32.xlu0 %v1849
  %v1851 = vpop.xlane.xlu0 %1850
  %v1852 = vsel %vm61, %v1790, 0.0
  %1853 = vadd.xlane.f32.xlu0 %v1852
  %v1854 = vpop.xlane.xlu0 %1853
  %v1855 = vsel %vm61, %v1791, 0.0
  %1856 = vadd.xlane.f32.xlu0 %v1855
  %v1857 = vpop.xlane.xlu0 %1856
  %v1858 = vsel %vm61, %v1792, 0.0
  %1859 = vadd.xlane.f32.xlu0 %v1858
  %v1860 = vpop.xlane.xlu0 %1859
  %v1861 = vsel %vm61, %v1793, 0.0
  %1862 = vadd.xlane.f32.xlu0 %v1861
  %v1863 = vpop.xlane.xlu0 %1862
  %v1864 = vsel %vm61, %v1794, 0.0
  %1865 = vadd.xlane.f32.xlu0 %v1864
  %v1866 = vpop.xlane.xlu0 %1865
  %v1867 = vsel %vm61, %v1795, 0.0
  %1868 = vadd.xlane.f32.xlu0 %v1867
  %v1869 = vpop.xlane.xlu0 %1868
  %v1870 = vsel %vm61, %v1796, 0.0
  %1871 = vadd.xlane.f32.xlu0 %v1870
  %v1872 = vpop.xlane.xlu0 %1871
  %v1873 = vsel %vm61, %v1797, 0.0
  %1874 = vadd.xlane.f32.xlu0 %v1873
  %v1875 = vpop.xlane.xlu0 %1874
  %v1876 = vsel %vm61, %v1798, 0.0
  %1877 = vadd.xlane.f32.xlu0 %v1876
  %v1878 = vpop.xlane.xlu0 %1877
  %v1879 = vsel %vm61, %v1799, 0.0
  %1880 = vadd.xlane.f32.xlu0 %v1879
  %v1881 = vpop.xlane.xlu0 %1880
  %v1882 = vsel %vm61, %v1800, 0.0
  %1883 = vadd.xlane.f32.xlu0 %v1882
  %v1884 = vpop.xlane.xlu0 %1883
  %v1885 = vsel %vm61, %v1801, 0.0
  %1886 = vadd.xlane.f32.xlu0 %v1885
  %v1887 = vpop.xlane.xlu0 %1886
  %v1888 = vsel %vm61, %v1802, 0.0
  %1889 = vadd.xlane.f32.xlu0 %v1888
  %v1890 = vpop.xlane.xlu0 %1889
  %v1891 = vsel %vm61, %v1803, 0.0
  %1892 = vadd.xlane.f32.xlu0 %v1891
  %v1893 = vpop.xlane.xlu0 %1892
  %v1894 = vsel %vm61, %v1804, 0.0
  %1895 = vadd.xlane.f32.xlu0 %v1894
  %v1896 = vpop.xlane.xlu0 %1895
  %v1897 = vsel %vm61, %v1805, 0.0
  %1898 = vadd.xlane.f32.xlu0 %v1897
  %v1899 = vpop.xlane.xlu0 %1898
  %v1900 = vsel %vm61, %v1806, 0.0
  %1901 = vadd.xlane.f32.xlu0 %v1900
  %v1902 = vpop.xlane.xlu0 %1901
  %v1903 = vadd.f32 %v1809, 1e-08
  %v1904 = vadd.f32 %v1812, 1e-08
  %v1905 = vadd.f32 %v1815, 1e-08
  %v1906 = vadd.f32 %v1818, 1e-08
  %v1907 = vadd.f32 %v1821, 1e-08
  %v1908 = vadd.f32 %v1824, 1e-08
  %v1909 = vadd.f32 %v1827, 1e-08
  %v1910 = vadd.f32 %v1830, 1e-08
  %v1911 = vadd.f32 %v1833, 1e-08
  %v1912 = vadd.f32 %v1836, 1e-08
  %v1913 = vadd.f32 %v1839, 1e-08
  %v1914 = vadd.f32 %v1842, 1e-08
  %v1915 = vadd.f32 %v1845, 1e-08
  %v1916 = vadd.f32 %v1848, 1e-08
  %v1917 = vadd.f32 %v1851, 1e-08
  %v1918 = vadd.f32 %v1854, 1e-08
  %v1919 = vadd.f32 %v1857, 1e-08
  %v1920 = vadd.f32 %v1860, 1e-08
  %v1921 = vadd.f32 %v1863, 1e-08
  %v1922 = vadd.f32 %v1866, 1e-08
  %v1923 = vadd.f32 %v1869, 1e-08
  %v1924 = vadd.f32 %v1872, 1e-08
  %v1925 = vadd.f32 %v1875, 1e-08
  %v1926 = vadd.f32 %v1878, 1e-08
  %v1927 = vadd.f32 %v1881, 1e-08
  %v1928 = vadd.f32 %v1884, 1e-08
  %v1929 = vadd.f32 %v1887, 1e-08
  %v1930 = vadd.f32 %v1890, 1e-08
  %v1931 = vadd.f32 %v1893, 1e-08
  %v1932 = vadd.f32 %v1896, 1e-08
  %v1933 = vadd.f32 %v1899, 1e-08
  %v1934 = vadd.f32 %v1902, 1e-08
  %v1935 = vrsqrt.pop %v1903
  %v1936 = vrsqrt.pop %v1904
  %v1937 = vrsqrt.pop %v1905
  %v1938 = vrsqrt.pop %v1906
  %v1939 = vrsqrt.pop %v1907
  %v1940 = vrsqrt.pop %v1908
  %v1941 = vrsqrt.pop %v1909
  %v1942 = vrsqrt.pop %v1910
  %v1943 = vrsqrt.pop %v1911
  %v1944 = vrsqrt.pop %v1912
  %v1945 = vrsqrt.pop %v1913
  %v1946 = vrsqrt.pop %v1914
  %v1947 = vrsqrt.pop %v1915
  %v1948 = vrsqrt.pop %v1916
  %v1949 = vrsqrt.pop %v1917
  %v1950 = vrsqrt.pop %v1918
  %v1951 = vrsqrt.pop %v1919
  %v1952 = vrsqrt.pop %v1920
  %v1953 = vrsqrt.pop %v1921
  %v1954 = vrsqrt.pop %v1922
  %v1955 = vrsqrt.pop %v1923
  %v1956 = vrsqrt.pop %v1924
  %v1957 = vrsqrt.pop %v1925
  %v1958 = vrsqrt.pop %v1926
  %v1959 = vrsqrt.pop %v1927
  %v1960 = vrsqrt.pop %v1928
  %v1961 = vrsqrt.pop %v1929
  %v1962 = vrsqrt.pop %v1930
  %v1963 = vrsqrt.pop %v1931
  %v1964 = vrsqrt.pop %v1932
  %v1965 = vrsqrt.pop %v1933
  %v1966 = vrsqrt.pop %v1934
  %v1967 = vmul.f32 %v1743, %v1935
  %v1968 = vmul.f32 %v1744, %v1936
  %v1969 = vmul.f32 %v1745, %v1937
  %v1970 = vmul.f32 %v1746, %v1938
  %v1971 = vmul.f32 %v1747, %v1939
  %v1972 = vmul.f32 %v1748, %v1940
  %v1973 = vmul.f32 %v1749, %v1941
  %v1974 = vmul.f32 %v1750, %v1942
  %v1975 = vmul.f32 %v1751, %v1943
  %v1976 = vmul.f32 %v1752, %v1944
  %v1977 = vmul.f32 %v1753, %v1945
  %v1978 = vmul.f32 %v1754, %v1946
  %v1979 = vmul.f32 %v1755, %v1947
  %v1980 = vmul.f32 %v1756, %v1948
  %v1981 = vmul.f32 %v1757, %v1949
  %v1982 = vmul.f32 %v1758, %v1950
  %v1983 = vmul.f32 %v1759, %v1951
  %v1984 = vmul.f32 %v1760, %v1952
  %v1985 = vmul.f32 %v1761, %v1953
  %v1986 = vmul.f32 %v1762, %v1954
  %v1987 = vmul.f32 %v1763, %v1955
  %v1988 = vmul.f32 %v1764, %v1956
  %v1989 = vmul.f32 %v1765, %v1957
  %v1990 = vmul.f32 %v1766, %v1958
  %v1991 = vmul.f32 %v1767, %v1959
  %v1992 = vmul.f32 %v1768, %v1960
  %v1993 = vmul.f32 %v1769, %v1961
  %v1994 = vmul.f32 %v1770, %v1962
  %v1995 = vmul.f32 %v1771, %v1963
  %v1996 = vmul.f32 %v1772, %v1964
  %v1997 = vmul.f32 %v1773, %v1965
  %v1998 = vmul.f32 %v1774, %v1966
  %v1999 = vlaneseq
  %v2000 = vshrl.u32 %v1999, 7
  %v2001 = vadd.s32 %v2000, 8
  %v2002 = vadd.s32 %v2000, 16
  %v2003 = vadd.s32 %v2000, 24
  %v2004 = vadd.s32 %v2000, 32
  %v2005 = vadd.s32 %v2000, 40
  %v2006 = vadd.s32 %v2000, 48
  %v2007 = vadd.s32 %v2000, 56
  %v2008 = vadd.s32 %v2000, 64
  %v2009 = vadd.s32 %v2000, 72
  %v2010 = vadd.s32 %v2000, 80
  %v2011 = vadd.s32 %v2000, 88
  %v2012 = vadd.s32 %v2000, 96
  %v2013 = vadd.s32 %v2000, 104
  %v2014 = vadd.s32 %v2000, 112
  %v2015 = vadd.s32 %v2000, 120
  %v2016 = vadd.s32 %v2000, 128
  %v2017 = vadd.s32 %v2000, 136
  %v2018 = vadd.s32 %v2000, 144
  %v2019 = vadd.s32 %v2000, 152
  %v2020 = vadd.s32 %v2000, 160
  %v2021 = vadd.s32 %v2000, 168
  %v2022 = vadd.s32 %v2000, 176
  %v2023 = vadd.s32 %v2000, 184
  %v2024 = vadd.s32 %v2000, 192
  %v2025 = vadd.s32 %v2000, 200
  %v2026 = vadd.s32 %v2000, 208
  %v2027 = vadd.s32 %v2000, 216
  %v2028 = vadd.s32 %v2000, 224
  %v2029 = vadd.s32 %v2000, 232
  %v2030 = vadd.s32 %v2000, 240
  %v2031 = vadd.s32 %v2000, 248
  %vm2032 = vcmp.lt.s32.totalorder %v2000, 200
  %vm2033 = vcmp.lt.s32.totalorder %v2001, 200
  %vm2034 = vcmp.lt.s32.totalorder %v2002, 200
  %vm2035 = vcmp.lt.s32.totalorder %v2003, 200
  %vm2036 = vcmp.lt.s32.totalorder %v2004, 200
  %vm2037 = vcmp.lt.s32.totalorder %v2005, 200
  %vm2038 = vcmp.lt.s32.totalorder %v2006, 200
  %vm2039 = vcmp.lt.s32.totalorder %v2007, 200
  %vm2040 = vcmp.lt.s32.totalorder %v2008, 200
  %vm2041 = vcmp.lt.s32.totalorder %v2009, 200
  %vm2042 = vcmp.lt.s32.totalorder %v2010, 200
  %vm2043 = vcmp.lt.s32.totalorder %v2011, 200
  %vm2044 = vcmp.lt.s32.totalorder %v2012, 200
  %vm2045 = vcmp.lt.s32.totalorder %v2013, 200
  %vm2046 = vcmp.lt.s32.totalorder %v2014, 200
  %vm2047 = vcmp.lt.s32.totalorder %v2015, 200
  %vm2048 = vcmp.lt.s32.totalorder %v2016, 200
  %vm2049 = vcmp.lt.s32.totalorder %v2017, 200
  %vm2050 = vcmp.lt.s32.totalorder %v2018, 200
  %vm2051 = vcmp.lt.s32.totalorder %v2019, 200
  %vm2052 = vcmp.lt.s32.totalorder %v2020, 200
  %vm2053 = vcmp.lt.s32.totalorder %v2021, 200
  %vm2054 = vcmp.lt.s32.totalorder %v2022, 200
  %vm2055 = vcmp.lt.s32.totalorder %v2023, 200
  %vm2056 = vcmp.lt.s32.totalorder %v2024, 200
  %vm2057 = vcmp.lt.s32.totalorder %v2025, 200
  %vm2058 = vcmp.lt.s32.totalorder %v2026, 200
  %vm2059 = vcmp.lt.s32.totalorder %v2027, 200
  %vm2060 = vcmp.lt.s32.totalorder %v2028, 200
  %vm2061 = vcmp.lt.s32.totalorder %v2029, 200
  %vm2062 = vcmp.lt.s32.totalorder %v2030, 200
  %vm2063 = vcmp.lt.s32.totalorder %v2031, 200
  %v2064 = vsel %vm2032, %v1967, 0.0
  %v2065 = vsel %vm2033, %v1968, 0.0
  %v2066 = vsel %vm2034, %v1969, 0.0
  %v2067 = vsel %vm2035, %v1970, 0.0
  %v2068 = vsel %vm2036, %v1971, 0.0
  %v2069 = vsel %vm2037, %v1972, 0.0
  %v2070 = vsel %vm2038, %v1973, 0.0
  %v2071 = vsel %vm2039, %v1974, 0.0
  %v2072 = vsel %vm2040, %v1975, 0.0
  %v2073 = vsel %vm2041, %v1976, 0.0
  %v2074 = vsel %vm2042, %v1977, 0.0
  %v2075 = vsel %vm2043, %v1978, 0.0
  %v2076 = vsel %vm2044, %v1979, 0.0
  %v2077 = vsel %vm2045, %v1980, 0.0
  %v2078 = vsel %vm2046, %v1981, 0.0
  %v2079 = vsel %vm2047, %v1982, 0.0
  %v2080 = vsel %vm2048, %v1983, 0.0
  %v2081 = vsel %vm2049, %v1984, 0.0
  %v2082 = vsel %vm2050, %v1985, 0.0
  %v2083 = vsel %vm2051, %v1986, 0.0
  %v2084 = vsel %vm2052, %v1987, 0.0
  %v2085 = vsel %vm2053, %v1988, 0.0
  %v2086 = vsel %vm2054, %v1989, 0.0
  %v2087 = vsel %vm2055, %v1990, 0.0
  %v2088 = vsel %vm2056, %v1991, 0.0
  %v2089 = vsel %vm2057, %v1992, 0.0
  %v2090 = vsel %vm2058, %v1993, 0.0
  %v2091 = vsel %vm2059, %v1994, 0.0
  %v2092 = vsel %vm2060, %v1995, 0.0
  %v2093 = vsel %vm2061, %v1996, 0.0
  %v2094 = vsel %vm2062, %v1997, 0.0
  %v2095 = vsel %vm2063, %v1998, 0.0
  %2096 = vst.msk [vmem:[%s5] sm:$0xff] %vm61, %v2064
  %2097 = vst.msk [vmem:[%s5 + $0x8] sm:$0xff] %vm61, %v2065
  %2098 = vst.msk [vmem:[%s5 + $0x10] sm:$0xff] %vm61, %v2066
  %2099 = vst.msk [vmem:[%s5 + $0x18] sm:$0xff] %vm61, %v2067
  %2100 = vst.msk [vmem:[%s5 + $0x20] sm:$0xff] %vm61, %v2068
  %2101 = vst.msk [vmem:[%s5 + $0x28] sm:$0xff] %vm61, %v2069
  %2102 = vst.msk [vmem:[%s5 + $0x30] sm:$0xff] %vm61, %v2070
  %2103 = vst.msk [vmem:[%s5 + $0x38] sm:$0xff] %vm61, %v2071
  %2104 = vst.msk [vmem:[%s5 + $0x40] sm:$0xff] %vm61, %v2072
  %2105 = vst.msk [vmem:[%s5 + $0x48] sm:$0xff] %vm61, %v2073
  %2106 = vst.msk [vmem:[%s5 + $0x50] sm:$0xff] %vm61, %v2074
  %2107 = vst.msk [vmem:[%s5 + $0x58] sm:$0xff] %vm61, %v2075
  %2108 = vst.msk [vmem:[%s5 + $0x60] sm:$0xff] %vm61, %v2076
  %2109 = vst.msk [vmem:[%s5 + $0x68] sm:$0xff] %vm61, %v2077
  %2110 = vst.msk [vmem:[%s5 + $0x70] sm:$0xff] %vm61, %v2078
  %2111 = vst.msk [vmem:[%s5 + $0x78] sm:$0xff] %vm61, %v2079
  %2112 = vst.msk [vmem:[%s5 + $0x80] sm:$0xff] %vm61, %v2080
  %2113 = vst.msk [vmem:[%s5 + $0x88] sm:$0xff] %vm61, %v2081
  %2114 = vst.msk [vmem:[%s5 + $0x90] sm:$0xff] %vm61, %v2082
  %2115 = vst.msk [vmem:[%s5 + $0x98] sm:$0xff] %vm61, %v2083
  %2116 = vst.msk [vmem:[%s5 + $0xa0] sm:$0xff] %vm61, %v2084
  %2117 = vst.msk [vmem:[%s5 + $0xa8] sm:$0xff] %vm61, %v2085
  %2118 = vst.msk [vmem:[%s5 + $0xb0] sm:$0xff] %vm61, %v2086
  %2119 = vst.msk [vmem:[%s5 + $0xb8] sm:$0xff] %vm61, %v2087
  %2120 = vst.msk [vmem:[%s5 + $0xc0] sm:$0xff] %vm61, %v2088
  %2121 = vst.msk [vmem:[%s5 + $0xc8] sm:$0xff] %vm61, %v2089
  %2122 = vst.msk [vmem:[%s5 + $0xd0] sm:$0xff] %vm61, %v2090
  %2123 = vst.msk [vmem:[%s5 + $0xd8] sm:$0xff] %vm61, %v2091
  %2124 = vst.msk [vmem:[%s5 + $0xe0] sm:$0xff] %vm61, %v2092
  %2125 = vst.msk [vmem:[%s5 + $0xe8] sm:$0xff] %vm61, %v2093
  %2126 = vst.msk [vmem:[%s5 + $0xf0] sm:$0xff] %vm61, %v2094
  %2127 = vst.msk [vmem:[%s5 + $0xf8] sm:$0xff] %vm61, %v2095
  // Predicated region
  $region22: #{tpu_custom_call.1} parent=0 // pred_check
    _
  $region23: #{tpu_custom_call.1} parent=0 // pred_check_branch
    %2129 = sbr.rel (0) target = $region25
  $region24: #{tpu_custom_call.1} parent=0 // pred_region
    _
  $region25: #{tpu_custom_call.1} parent=0 // pred_fallthru
    _
  // Predicated region
  $region26: #{tpu_custom_call.1} parent=0 // pred_check
    _
  $region27: #{tpu_custom_call.1} parent=0 // pred_check_branch
    %2131 = sbr.rel (0) target = $region29
  $region28: #{tpu_custom_call.1} parent=0 // pred_region
    _
  $region29: #{tpu_custom_call.1} parent=0 // pred_fallthru
    _

</llo_original>
